<compile_context>
chip_gen: v7x
topology: tpu7x:2x2x1
jax: 0.10.0
libtpu: 0.0.40
codegen_flags: <defaults>
</compile_context>

<pallas_src>
import functools

import jax
import jax.numpy as jnp
from jax import lax
from jax.experimental import pallas as pl
from jax.experimental.pallas import tpu as pltpu


def _mha_kernel(xq_ref, xkv_ref, wq_ref, bq_ref, wkv_ref, bkv_ref,
                wo_ref, bo_ref, o_ref, *, num_heads, head_dim, compute_dtype):
    """One (batch, query-tile) grid step, all heads fused.

    xq_ref  : (1, tq, D)     query tile of the input
    xkv_ref : (1, S, D)      full input (keys/values source)
    wq_ref  : (D, H*hd)      to_query weight, pre-transposed
    bq_ref  : (1, H*hd)
    wkv_ref : (D, 2*H*hd)    [to_key | to_value] weights, pre-transposed+fused
    bkv_ref : (1, 2*H*hd)
    wo_ref  : (H*hd, D)      unify_heads weight, pre-transposed
    bo_ref  : (1, D)
    o_ref   : (1, tq, D)
    """
    hd = head_dim
    HD = num_heads * hd

    xq = xq_ref[0].astype(compute_dtype)     # (tq, D)
    xkv = xkv_ref[0].astype(compute_dtype)   # (S,  D)

    # Fused projections (full-width MXU matmuls).  Fold the module's scale
    # `scores / (head_dim ** 1 / 2)`  ==  scores * (2 / head_dim)  into q.
    q = jnp.dot(xq, wq_ref[...], preferred_element_type=jnp.float32) + bq_ref[...]
    q = q * (2.0 / float(hd))                                          # (tq, HD) f32
    kv = jnp.dot(xkv, wkv_ref[...], preferred_element_type=jnp.float32) + bkv_ref[...]
    k = kv[:, :HD]                                                     # (S, HD) f32
    v = kv[:, HD:]                                                     # (S, HD) f32

    # Attention core, statically unrolled over heads (head_dim-sized
    # contractions are inherent to attention; projections are already fused).
    # TODO(synk): optional `mask` argument of forward() is not exercised here.
    outs = []
    for h in range(num_heads):
        lo = h * hd
        qh = q[:, lo:lo + hd].astype(compute_dtype)                    # (tq, hd)
        kh = k[:, lo:lo + hd].astype(compute_dtype)                    # (S,  hd)
        vh = v[:, lo:lo + hd].astype(compute_dtype)                    # (S,  hd)

        # q @ k^T with the contraction on the last dim of both operands
        # (no materialized transpose of k).
        s = lax.dot_general(qh, kh, (((1,), (1,)), ((), ())),
                            preferred_element_type=jnp.float32)        # (tq, S)

        m = jnp.max(s, axis=-1, keepdims=True)
        e = jnp.exp(s - m)                                             # unnormalized
        l = jnp.sum(e, axis=-1, keepdims=True)                         # (tq, 1)

        oh = jnp.dot(e.astype(compute_dtype), vh,
                     preferred_element_type=jnp.float32)               # (tq, hd)
        # Deferred softmax normalization: scale (tq, hd) instead of (tq, S).
        # (approx=True routes to the EUP slot if looser tolerance is acceptable.)
        oh = oh * pl.reciprocal(l, approx=False)
        outs.append(oh)

    out_heads = jnp.concatenate(outs, axis=-1)                         # (tq, HD)

    # Fused unify_heads: single (tq, HD) @ (HD, D) matmul.
    o = jnp.dot(out_heads.astype(compute_dtype), wo_ref[...],
                preferred_element_type=jnp.float32) + bo_ref[...]
    o_ref[0] = o.astype(o_ref.dtype)


def multi_head_attention(x, params, *, num_heads, q_block_size=None,
                         compute_dtype=None):
    """x: (B, S, D).  params: PyTorch-layout Linear weights (W: (out, in))."""
    B, S, D = x.shape
    hd = D // num_heads
    HD = num_heads * hd

    if compute_dtype is None:
        # Use jnp.bfloat16 here on v6e/v7x for the fast MXU path (loosen the
        # validation tolerance accordingly).
        compute_dtype = x.dtype

    # Query tiling: second "parallel" grid axis (v7x megacore) and bounds the
    # per-step VMEM footprint for long sequences.
    if q_block_size is None:
        q_block_size = S if S <= 512 else 512
    if S % q_block_size != 0:
        q_block_size = S  # TODO(synk): ragged (masked) query tiles not implemented
    tq = q_block_size
    nq = S // tq

    f32 = jnp.float32
    # PyTorch Linear: y = x @ W.T + b.  Pre-transpose so the kernel does x @ W,
    # and fuse K/V weights so they are a single matmul.
    wq = jnp.transpose(params["wq"]).astype(compute_dtype)                    # (D, HD)
    wkv = jnp.concatenate(
        [jnp.transpose(params["wk"]), jnp.transpose(params["wv"])],
        axis=1).astype(compute_dtype)                                         # (D, 2*HD)
    wo = jnp.transpose(params["wo"]).astype(compute_dtype)                    # (HD, D)
    bq = params["bq"].reshape(1, HD).astype(f32)
    bkv = jnp.concatenate([params["bk"], params["bv"]]).reshape(1, 2 * HD).astype(f32)
    bo = params["bo"].reshape(1, D).astype(f32)

    kernel = functools.partial(_mha_kernel, num_heads=num_heads, head_dim=hd,
                               compute_dtype=compute_dtype)

    # NOTE: for production shapes keep D a multiple of 128 so the output store
    # is lane-dense (D=32 in the demo lowers to masked partial stores).
    return pl.pallas_call(
        kernel,
        out_shape=jax.ShapeDtypeStruct((B, S, D), x.dtype),
        grid_spec=pltpu.PrefetchScalarGridSpec(
            num_scalar_prefetch=0,
            grid=(B, nq),
            in_specs=[
                pl.BlockSpec((1, tq, D), lambda b, qi: (b, qi, 0)),   # x (query tile)
                pl.BlockSpec((1, S, D), lambda b, qi: (b, 0, 0)),     # x (full KV src)
                pl.BlockSpec((D, HD), lambda b, qi: (0, 0)),          # Wq  (fetched once)
                pl.BlockSpec((1, HD), lambda b, qi: (0, 0)),          # bq
                pl.BlockSpec((D, 2 * HD), lambda b, qi: (0, 0)),      # Wkv (fetched once)
                pl.BlockSpec((1, 2 * HD), lambda b, qi: (0, 0)),      # bkv
                pl.BlockSpec((HD, D), lambda b, qi: (0, 0)),          # Wo  (fetched once)
                pl.BlockSpec((1, D), lambda b, qi: (0, 0)),           # bo
            ],
            out_specs=pl.BlockSpec((1, tq, D), lambda b, qi: (b, qi, 0)),
        ),
        compiler_params=pltpu.CompilerParams(
            dimension_semantics=("parallel", "parallel"),
        ),
    )(x, x, wq, bq, wkv, bkv, wo, bo)


def _reference(x, params, *, num_heads):
    """Pure-JAX reference mirroring the PyTorch forward exactly."""
    B, S, D = x.shape
    hd = D // num_heads
    q = (x @ params["wq"].T + params["bq"]).reshape(B, S, num_heads, hd).transpose(0, 2, 1, 3)
    k = (x @ params["wk"].T + params["bk"]).reshape(B, S, num_heads, hd).transpose(0, 2, 1, 3)
    v = (x @ params["wv"].T + params["bv"]).reshape(B, S, num_heads, hd).transpose(0, 2, 1, 3)
    scores = jnp.einsum("bhqd,bhkd->bhqk", q, k) / (hd ** 1 / float(2))
    p = jax.nn.softmax(scores, axis=-1)
    out = jnp.einsum("bhqk,bhkd->bhqd", p, v).transpose(0, 2, 1, 3).reshape(B, S, D)
    return out @ params["wo"].T + params["bo"]


if __name__ == "__main__":
    B, S, d_model, heads = 2, 8, 32, 4

    key = jax.random.PRNGKey(0)
    ks = jax.random.split(key, 9)
    bound = 1.0 / (d_model ** 0.5)   # PyTorch Linear default init range

    params = {
        "wq": jax.random.uniform(ks[0], (d_model, d_model), jnp.float32, -bound, bound),
        "bq": jax.random.uniform(ks[1], (d_model,), jnp.float32, -bound, bound),
        "wk": jax.random.uniform(ks[2], (d_model, d_model), jnp.float32, -bound, bound),
        "bk": jax.random.uniform(ks[3], (d_model,), jnp.float32, -bound, bound),
        "wv": jax.random.uniform(ks[4], (d_model, d_model), jnp.float32, -bound, bound),
        "bv": jax.random.uniform(ks[5], (d_model,), jnp.float32, -bound, bound),
        "wo": jax.random.uniform(ks[6], (d_model, d_model), jnp.float32, -bound, bound),
        "bo": jax.random.uniform(ks[7], (d_model,), jnp.float32, -bound, bound),
    }
    x = jax.random.normal(ks[8], (B, S, d_model), jnp.float32)

    out = multi_head_attention(x, params, num_heads=heads)
    out = jax.block_until_ready(out)

    ref = _reference(x, params, num_heads=heads)
    assert out.shape == (B, S, d_model)
    assert jnp.allclose(out, ref, atol=1e-4, rtol=1e-4), "mismatch vs reference"

    print("KERNEL_OK")
</pallas_src>

<mosaic_0001>
module attributes {stable_mosaic.version = 11 : i64} {
  func.func @_mha_kernel(%arg0: i32, %arg1: i32, %arg2: memref<1x8x32xf32, #tpu.memory_space<vmem>>, %arg3: memref<1x8x32xf32, #tpu.memory_space<vmem>>, %arg4: memref<32x32xf32, #tpu.memory_space<vmem>>, %arg5: memref<1x32xf32, #tpu.memory_space<vmem>>, %arg6: memref<32x64xf32, #tpu.memory_space<vmem>>, %arg7: memref<1x64xf32, #tpu.memory_space<vmem>>, %arg8: memref<32x32xf32, #tpu.memory_space<vmem>>, %arg9: memref<1x32xf32, #tpu.memory_space<vmem>>, %arg10: memref<1x8x32xf32, #tpu.memory_space<vmem>>) attributes {dimension_semantics = [#tpu.dimension_semantics<parallel>, #tpu.dimension_semantics<parallel>], iteration_bounds = array<i64: 2, 1>, scalar_prefetch = 0 : i64, scratch_operands = 0 : i64, tpu.core_type = #tpu.core_type<tc>, window_params = [{transform_indices = @transform_0, window_bounds = array<i64: 1, 8, 32>}, {transform_indices = @transform_1, window_bounds = array<i64: 1, 8, 32>}, {pipeline_mode = #tpu.pipeline_mode<synchronous>, transform_indices = @transform_2, window_bounds = array<i64: 32, 32>}, {pipeline_mode = #tpu.pipeline_mode<synchronous>, transform_indices = @transform_3, window_bounds = array<i64: 1, 32>}, {pipeline_mode = #tpu.pipeline_mode<synchronous>, transform_indices = @transform_4, window_bounds = array<i64: 32, 64>}, {pipeline_mode = #tpu.pipeline_mode<synchronous>, transform_indices = @transform_5, window_bounds = array<i64: 1, 64>}, {pipeline_mode = #tpu.pipeline_mode<synchronous>, transform_indices = @transform_6, window_bounds = array<i64: 32, 32>}, {pipeline_mode = #tpu.pipeline_mode<synchronous>, transform_indices = @transform_7, window_bounds = array<i64: 1, 32>}, {transform_indices = @transform_8, window_bounds = array<i64: 1, 8, 32>}]} {
    %c0 = arith.constant 0 : index
    %c0_0 = arith.constant 0 : index
    %c0_1 = arith.constant 0 : index
    %0 = vector.load %arg2[%c0, %c0_0, %c0_1] : memref<1x8x32xf32, #tpu.memory_space<vmem>>, vector<1x8x32xf32>
    %1 = vector.shape_cast %0 : vector<1x8x32xf32> to vector<8x32xf32>
    %c0_2 = arith.constant 0 : index
    %c0_3 = arith.constant 0 : index
    %c0_4 = arith.constant 0 : index
    %2 = vector.load %arg3[%c0_2, %c0_3, %c0_4] : memref<1x8x32xf32, #tpu.memory_space<vmem>>, vector<1x8x32xf32>
    %3 = vector.shape_cast %2 : vector<1x8x32xf32> to vector<8x32xf32>
    %c0_5 = arith.constant 0 : index
    %c0_6 = arith.constant 0 : index
    %4 = vector.load %arg4[%c0_5, %c0_6] : memref<32x32xf32, #tpu.memory_space<vmem>>, vector<32x32xf32>
    %cst = arith.constant dense<0.000000e+00> : vector<8x32xf32>
    %5 = tpu.matmul %1, %4, %cst {dimension_numbers = #tpu.dot_dimension_numbers<[1], [0], [0], [1], [0, 0, 1, 1], [], []>} : vector<8x32xf32>, vector<32x32xf32>, vector<8x32xf32> -> vector<8x32xf32>
    %c0_7 = arith.constant 0 : index
    %c0_8 = arith.constant 0 : index
    %6 = vector.load %arg5[%c0_7, %c0_8] : memref<1x32xf32, #tpu.memory_space<vmem>>, vector<1x32xf32>
    %7 = vector.broadcast %6 : vector<1x32xf32> to vector<8x32xf32>
    %8 = arith.addf %5, %7 : vector<8x32xf32>
    %cst_9 = arith.constant 2.500000e-01 : f32
    %9 = vector.broadcast %cst_9 : f32 to vector<8x32xf32>
    %10 = arith.mulf %8, %9 : vector<8x32xf32>
    %c0_10 = arith.constant 0 : index
    %c0_11 = arith.constant 0 : index
    %11 = vector.load %arg6[%c0_10, %c0_11] : memref<32x64xf32, #tpu.memory_space<vmem>>, vector<32x64xf32>
    %cst_12 = arith.constant dense<0.000000e+00> : vector<8x64xf32>
    %12 = tpu.matmul %3, %11, %cst_12 {dimension_numbers = #tpu.dot_dimension_numbers<[1], [0], [0], [1], [0, 0, 1, 1], [], []>} : vector<8x32xf32>, vector<32x64xf32>, vector<8x64xf32> -> vector<8x64xf32>
    %c0_13 = arith.constant 0 : index
    %c0_14 = arith.constant 0 : index
    %13 = vector.load %arg7[%c0_13, %c0_14] : memref<1x64xf32, #tpu.memory_space<vmem>>, vector<1x64xf32>
    %14 = vector.broadcast %13 : vector<1x64xf32> to vector<8x64xf32>
    %15 = arith.addf %12, %14 : vector<8x64xf32>
    %16 = vector.extract_strided_slice %15 {offsets = [0, 0], sizes = [8, 32], strides = [1, 1]} : vector<8x64xf32> to vector<8x32xf32>
    %17 = vector.extract_strided_slice %15 {offsets = [0, 32], sizes = [8, 32], strides = [1, 1]} : vector<8x64xf32> to vector<8x32xf32>
    %18 = vector.extract_strided_slice %10 {offsets = [0, 0], sizes = [8, 8], strides = [1, 1]} : vector<8x32xf32> to vector<8x8xf32>
    %19 = vector.extract_strided_slice %16 {offsets = [0, 0], sizes = [8, 8], strides = [1, 1]} : vector<8x32xf32> to vector<8x8xf32>
    %20 = vector.extract_strided_slice %17 {offsets = [0, 0], sizes = [8, 8], strides = [1, 1]} : vector<8x32xf32> to vector<8x8xf32>
    %cst_15 = arith.constant dense<0.000000e+00> : vector<8x8xf32>
    %21 = tpu.matmul %18, %19, %cst_15 {dimension_numbers = #tpu.dot_dimension_numbers<[1], [1], [0], [0], [0, 0, 1, 0], [], []>} : vector<8x8xf32>, vector<8x8xf32>, vector<8x8xf32> -> vector<8x8xf32>
    %cst_16 = arith.constant dense<0xFF800000> : vector<8xf32>
    %22 = vector.multi_reduction <maximumf>, %21, %cst_16 [1] : vector<8x8xf32> to vector<8xf32>
    %23 = vector.shape_cast %22 : vector<8xf32> to vector<8x1xf32>
    %24 = vector.broadcast %23 : vector<8x1xf32> to vector<8x8xf32>
    %25 = arith.subf %21, %24 : vector<8x8xf32>
    %26 = math.exp %25 : vector<8x8xf32>
    %cst_17 = arith.constant dense<0.000000e+00> : vector<8xf32>
    %27 = vector.multi_reduction <add>, %26, %cst_17 [1] : vector<8x8xf32> to vector<8xf32>
    %28 = vector.shape_cast %27 : vector<8xf32> to vector<8x1xf32>
    %cst_18 = arith.constant dense<0.000000e+00> : vector<8x8xf32>
    %29 = tpu.matmul %26, %20, %cst_18 {dimension_numbers = #tpu.dot_dimension_numbers<[1], [0], [0], [1], [0, 0, 1, 1], [], []>} : vector<8x8xf32>, vector<8x8xf32>, vector<8x8xf32> -> vector<8x8xf32>
    %30 = tpu.reciprocal %28 : vector<8x1xf32> -> vector<8x1xf32>
    %31 = vector.broadcast %30 : vector<8x1xf32> to vector<8x8xf32>
    %32 = arith.mulf %29, %31 : vector<8x8xf32>
    %33 = vector.extract_strided_slice %10 {offsets = [0, 8], sizes = [8, 8], strides = [1, 1]} : vector<8x32xf32> to vector<8x8xf32>
    %34 = vector.extract_strided_slice %16 {offsets = [0, 8], sizes = [8, 8], strides = [1, 1]} : vector<8x32xf32> to vector<8x8xf32>
    %35 = vector.extract_strided_slice %17 {offsets = [0, 8], sizes = [8, 8], strides = [1, 1]} : vector<8x32xf32> to vector<8x8xf32>
    %cst_19 = arith.constant dense<0.000000e+00> : vector<8x8xf32>
    %36 = tpu.matmul %33, %34, %cst_19 {dimension_numbers = #tpu.dot_dimension_numbers<[1], [1], [0], [0], [0, 0, 1, 0], [], []>} : vector<8x8xf32>, vector<8x8xf32>, vector<8x8xf32> -> vector<8x8xf32>
    %cst_20 = arith.constant dense<0xFF800000> : vector<8xf32>
    %37 = vector.multi_reduction <maximumf>, %36, %cst_20 [1] : vector<8x8xf32> to vector<8xf32>
    %38 = vector.shape_cast %37 : vector<8xf32> to vector<8x1xf32>
    %39 = vector.broadcast %38 : vector<8x1xf32> to vector<8x8xf32>
    %40 = arith.subf %36, %39 : vector<8x8xf32>
    %41 = math.exp %40 : vector<8x8xf32>
    %cst_21 = arith.constant dense<0.000000e+00> : vector<8xf32>
    %42 = vector.multi_reduction <add>, %41, %cst_21 [1] : vector<8x8xf32> to vector<8xf32>
    %43 = vector.shape_cast %42 : vector<8xf32> to vector<8x1xf32>
    %cst_22 = arith.constant dense<0.000000e+00> : vector<8x8xf32>
    %44 = tpu.matmul %41, %35, %cst_22 {dimension_numbers = #tpu.dot_dimension_numbers<[1], [0], [0], [1], [0, 0, 1, 1], [], []>} : vector<8x8xf32>, vector<8x8xf32>, vector<8x8xf32> -> vector<8x8xf32>
    %45 = tpu.reciprocal %43 : vector<8x1xf32> -> vector<8x1xf32>
    %46 = vector.broadcast %45 : vector<8x1xf32> to vector<8x8xf32>
    %47 = arith.mulf %44, %46 : vector<8x8xf32>
    %48 = vector.extract_strided_slice %10 {offsets = [0, 16], sizes = [8, 8], strides = [1, 1]} : vector<8x32xf32> to vector<8x8xf32>
    %49 = vector.extract_strided_slice %16 {offsets = [0, 16], sizes = [8, 8], strides = [1, 1]} : vector<8x32xf32> to vector<8x8xf32>
    %50 = vector.extract_strided_slice %17 {offsets = [0, 16], sizes = [8, 8], strides = [1, 1]} : vector<8x32xf32> to vector<8x8xf32>
    %cst_23 = arith.constant dense<0.000000e+00> : vector<8x8xf32>
    %51 = tpu.matmul %48, %49, %cst_23 {dimension_numbers = #tpu.dot_dimension_numbers<[1], [1], [0], [0], [0, 0, 1, 0], [], []>} : vector<8x8xf32>, vector<8x8xf32>, vector<8x8xf32> -> vector<8x8xf32>
    %cst_24 = arith.constant dense<0xFF800000> : vector<8xf32>
    %52 = vector.multi_reduction <maximumf>, %51, %cst_24 [1] : vector<8x8xf32> to vector<8xf32>
    %53 = vector.shape_cast %52 : vector<8xf32> to vector<8x1xf32>
    %54 = vector.broadcast %53 : vector<8x1xf32> to vector<8x8xf32>
    %55 = arith.subf %51, %54 : vector<8x8xf32>
    %56 = math.exp %55 : vector<8x8xf32>
    %cst_25 = arith.constant dense<0.000000e+00> : vector<8xf32>
    %57 = vector.multi_reduction <add>, %56, %cst_25 [1] : vector<8x8xf32> to vector<8xf32>
    %58 = vector.shape_cast %57 : vector<8xf32> to vector<8x1xf32>
    %cst_26 = arith.constant dense<0.000000e+00> : vector<8x8xf32>
    %59 = tpu.matmul %56, %50, %cst_26 {dimension_numbers = #tpu.dot_dimension_numbers<[1], [0], [0], [1], [0, 0, 1, 1], [], []>} : vector<8x8xf32>, vector<8x8xf32>, vector<8x8xf32> -> vector<8x8xf32>
    %60 = tpu.reciprocal %58 : vector<8x1xf32> -> vector<8x1xf32>
    %61 = vector.broadcast %60 : vector<8x1xf32> to vector<8x8xf32>
    %62 = arith.mulf %59, %61 : vector<8x8xf32>
    %63 = vector.extract_strided_slice %10 {offsets = [0, 24], sizes = [8, 8], strides = [1, 1]} : vector<8x32xf32> to vector<8x8xf32>
    %64 = vector.extract_strided_slice %16 {offsets = [0, 24], sizes = [8, 8], strides = [1, 1]} : vector<8x32xf32> to vector<8x8xf32>
    %65 = vector.extract_strided_slice %17 {offsets = [0, 24], sizes = [8, 8], strides = [1, 1]} : vector<8x32xf32> to vector<8x8xf32>
    %cst_27 = arith.constant dense<0.000000e+00> : vector<8x8xf32>
    %66 = tpu.matmul %63, %64, %cst_27 {dimension_numbers = #tpu.dot_dimension_numbers<[1], [1], [0], [0], [0, 0, 1, 0], [], []>} : vector<8x8xf32>, vector<8x8xf32>, vector<8x8xf32> -> vector<8x8xf32>
    %cst_28 = arith.constant dense<0xFF800000> : vector<8xf32>
    %67 = vector.multi_reduction <maximumf>, %66, %cst_28 [1] : vector<8x8xf32> to vector<8xf32>
    %68 = vector.shape_cast %67 : vector<8xf32> to vector<8x1xf32>
    %69 = vector.broadcast %68 : vector<8x1xf32> to vector<8x8xf32>
    %70 = arith.subf %66, %69 : vector<8x8xf32>
    %71 = math.exp %70 : vector<8x8xf32>
    %cst_29 = arith.constant dense<0.000000e+00> : vector<8xf32>
    %72 = vector.multi_reduction <add>, %71, %cst_29 [1] : vector<8x8xf32> to vector<8xf32>
    %73 = vector.shape_cast %72 : vector<8xf32> to vector<8x1xf32>
    %cst_30 = arith.constant dense<0.000000e+00> : vector<8x8xf32>
    %74 = tpu.matmul %71, %65, %cst_30 {dimension_numbers = #tpu.dot_dimension_numbers<[1], [0], [0], [1], [0, 0, 1, 1], [], []>} : vector<8x8xf32>, vector<8x8xf32>, vector<8x8xf32> -> vector<8x8xf32>
    %75 = tpu.reciprocal %73 : vector<8x1xf32> -> vector<8x1xf32>
    %76 = vector.broadcast %75 : vector<8x1xf32> to vector<8x8xf32>
    %77 = arith.mulf %74, %76 : vector<8x8xf32>
    %78 = tpu.concatenate %32, %47, %62, %77 in 1 : vector<8x8xf32>, vector<8x8xf32>, vector<8x8xf32>, vector<8x8xf32> -> vector<8x32xf32>
    %c0_31 = arith.constant 0 : index
    %c0_32 = arith.constant 0 : index
    %79 = vector.load %arg8[%c0_31, %c0_32] : memref<32x32xf32, #tpu.memory_space<vmem>>, vector<32x32xf32>
    %cst_33 = arith.constant dense<0.000000e+00> : vector<8x32xf32>
    %80 = tpu.matmul %78, %79, %cst_33 {dimension_numbers = #tpu.dot_dimension_numbers<[1], [0], [0], [1], [0, 0, 1, 1], [], []>} : vector<8x32xf32>, vector<32x32xf32>, vector<8x32xf32> -> vector<8x32xf32>
    %c0_34 = arith.constant 0 : index
    %c0_35 = arith.constant 0 : index
    %81 = vector.load %arg9[%c0_34, %c0_35] : memref<1x32xf32, #tpu.memory_space<vmem>>, vector<1x32xf32>
    %82 = vector.broadcast %81 : vector<1x32xf32> to vector<8x32xf32>
    %83 = arith.addf %80, %82 : vector<8x32xf32>
    %c0_36 = arith.constant 0 : index
    %c0_37 = arith.constant 0 : index
    %c0_38 = arith.constant 0 : index
    %84 = vector.load %arg10[%c0_36, %c0_37, %c0_38] : memref<1x8x32xf32, #tpu.memory_space<vmem>>, vector<1x8x32xf32>
    %85 = vector.shape_cast %84 : vector<1x8x32xf32> to vector<8x32xf32>
    %86 = vector.shape_cast %83 : vector<8x32xf32> to vector<1x8x32xf32>
    tpu.vector_store %arg10[%c0_36, %c0_37, %c0_38], %86 {strides = array<i32>} : memref<1x8x32xf32, #tpu.memory_space<vmem>>, vector<1x8x32xf32>,
    return
  }
  func.func @transform_0(%arg0: i32, %arg1: i32) -> (i32, i32, i32) {
    %c0_i32 = arith.constant 0 : i32
    %c0_i32_0 = arith.constant 0 : i32
    return %arg0, %arg1, %c0_i32 : i32, i32, i32
  }
  func.func @transform_1(%arg0: i32, %arg1: i32) -> (i32, i32, i32) {
    %c0_i32 = arith.constant 0 : i32
    %c0_i32_0 = arith.constant 0 : i32
    %c0_i32_1 = arith.constant 0 : i32
    return %arg0, %c0_i32, %c0_i32_0 : i32, i32, i32
  }
  func.func @transform_2(%arg0: i32, %arg1: i32) -> (i32, i32) {
    %c0_i32 = arith.constant 0 : i32
    %c0_i32_0 = arith.constant 0 : i32
    %c0_i32_1 = arith.constant 0 : i32
    return %c0_i32, %c0_i32_0 : i32, i32
  }
  func.func @transform_3(%arg0: i32, %arg1: i32) -> (i32, i32) {
    %c0_i32 = arith.constant 0 : i32
    %c0_i32_0 = arith.constant 0 : i32
    %c0_i32_1 = arith.constant 0 : i32
    return %c0_i32, %c0_i32_0 : i32, i32
  }
  func.func @transform_4(%arg0: i32, %arg1: i32) -> (i32, i32) {
    %c0_i32 = arith.constant 0 : i32
    %c0_i32_0 = arith.constant 0 : i32
    %c0_i32_1 = arith.constant 0 : i32
    return %c0_i32, %c0_i32_0 : i32, i32
  }
  func.func @transform_5(%arg0: i32, %arg1: i32) -> (i32, i32) {
    %c0_i32 = arith.constant 0 : i32
    %c0_i32_0 = arith.constant 0 : i32
    %c0_i32_1 = arith.constant 0 : i32
    return %c0_i32, %c0_i32_0 : i32, i32
  }
  func.func @transform_6(%arg0: i32, %arg1: i32) -> (i32, i32) {
    %c0_i32 = arith.constant 0 : i32
    %c0_i32_0 = arith.constant 0 : i32
    %c0_i32_1 = arith.constant 0 : i32
    return %c0_i32, %c0_i32_0 : i32, i32
  }
  func.func @transform_7(%arg0: i32, %arg1: i32) -> (i32, i32) {
    %c0_i32 = arith.constant 0 : i32
    %c0_i32_0 = arith.constant 0 : i32
    %c0_i32_1 = arith.constant 0 : i32
    return %c0_i32, %c0_i32_0 : i32, i32
  }
  func.func @transform_8(%arg0: i32, %arg1: i32) -> (i32, i32, i32) {
    %c0_i32 = arith.constant 0 : i32
    %c0_i32_0 = arith.constant 0 : i32
    return %arg0, %arg1, %c0_i32 : i32, i32, i32
  }
}

</mosaic_0001>

<llo_original>
// kernel: tpu_custom_call.1
$region0: #{tpu_custom_call.1}
  #allocation0 [shape = 'u32[]', space=smem, size = 0x4, offset = 0x4, fixed_abs, tag = 'smem constant byte address 0x4 - core index']
  #allocation1 [shape = 'u32[144,128]{1,0:T(1,128)}', space=vmem, size = 0x12000, scoped, tag = 'internal scratch']
  %s0 = inlined_call_operand.hbm [shape: f32[2,8,32], index: 0, kind: input, shape index: {}]
  %s1 = inlined_call_operand.hbm [shape: f32[2,8,32], index: 1, kind: input, shape index: {}]
  %s2 = inlined_call_operand.hbm [shape: f32[32,32], index: 2, kind: input, shape index: {}]
  %s3 = inlined_call_operand.vmem [shape: f32[1,32], index: 3, kind: input, shape index: {}]
  %s4 = inlined_call_operand.hbm [shape: f32[32,64], index: 4, kind: input, shape index: {}]
  %s5 = inlined_call_operand.vmem [shape: f32[1,64], index: 5, kind: input, shape index: {}]
  %s6 = inlined_call_operand.hbm [shape: f32[32,32], index: 6, kind: input, shape index: {}]
  %s7 = inlined_call_operand.vmem [shape: f32[1,32], index: 7, kind: input, shape index: {}]
  %s8 = inlined_call_operand.hbm [shape: f32[2,8,32], index: 8, kind: output, shape index: {}]
  %s9 = sld [smem:[#allocation0]]
  $region85: #{tpu_custom_call.1} parent=0
    _
  %s11 = ssub.s32 1, %s9
  %s12 = scalar_select 0, %s11, %s9
  $region1: #{tpu_custom_call.1} parent=0
    #allocation2 [shape = 'u8[8192]{0}', space=vmem, size = 0x2000, scoped, tag = 'input window, operand 0']
    #allocation3 [shape = 's32[2]{0}', space=sflag, size = 0x8, scoped, tag = 'scoped memory for tpu_custom_call.1']
    #allocation4 [shape = 's32[2]{0}', space=sflag, size = 0x8, scoped, tag = 'scoped memory for tpu_custom_call.1']
    #allocation5 [shape = 'u8[8192]{0}', space=vmem, size = 0x2000, scoped, tag = 'input window, operand 1']
    #allocation6 [shape = 's32[2]{0}', space=sflag, size = 0x8, scoped, tag = 'scoped memory for tpu_custom_call.1']
    #allocation7 [shape = 'u8[16384]{0}', space=vmem, size = 0x4000, scoped, tag = 'input window, operand 2, single buffered']
    #allocation8 [shape = 'u8[16384]{0}', space=vmem, size = 0x4000, scoped, tag = 'input window, operand 4, single buffered']
    #allocation9 [shape = 's32[1]{0}', space=sflag, size = 0x4, scoped, tag = 'scoped memory for tpu_custom_call.1']
    #allocation10 [shape = 'u8[16384]{0}', space=vmem, size = 0x4000, scoped, tag = 'input window, operand 6, single buffered']
    #allocation11 [shape = 'u8[8192]{0}', space=vmem, size = 0x2000, scoped, tag = 'output window, operand 0']
    %13 = vsyncpa [#allocation3], 0
    %s14 = scalar_lea.sflag [#allocation3], 1
    %15 = vsyncpa %s14, 0
    %16 = vsyncpa [#allocation6], 0
    %s17 = scalar_lea.sflag [#allocation6], 1
    %18 = vsyncpa %s17, 0
    %19 = vsyncpa [#allocation9], 0
    %20 = vsyncpa [#allocation4], 0
    %s21 = scalar_lea.sflag [#allocation4], 1
    %22 = vsyncpa %s21, 0
    loop: start=0, step=1, limit=4
    $region2: #{tpu_custom_call.1} parent=1 // loop_pre_header
      _
    $region3: #{tpu_custom_call.1} parent=1 // loop_header
      %s24 = sphi 0, %s28
      %p25 = scmp.ge.s32.totalorder %s24, 4
      %s31 = sphi 0, %s43
      %s32 = sphi 0, %s39
      %s33 = sphi 0, %s31
      %s34 = sphi 0, %s32
      %s35 = sphi 0, %s33
      %s36 = sphi 0, %s34
      %s48 = sphi 0, %s50
      %s51 = sphi 0, %s48
      %s52 = sphi 0, %s51
      %s68 = sphi 0, %s52
      %s74 = sphi 0, %s76
      %s77 = sphi 0, %s74
      %s78 = sphi 0, %s77
      %s94 = sphi 0, %s78
      %s98 = sphi 0, %s98
      %s100 = sphi 0, %s98
      %s101 = sphi 0, %s100
      %s115 = sphi 0, %s101
      %s119 = sphi 0, %s119
      %s121 = sphi 0, %s119
      %s122 = sphi 0, %s121
      %s136 = sphi 0, %s122
      %s140 = sphi 0, %s140
      %s142 = sphi 0, %s140
      %s143 = sphi 0, %s142
      %s157 = sphi 0, %s143
      %s161 = sphi 0, %s161
      %s163 = sphi 0, %s161
      %s164 = sphi 0, %s163
      %s178 = sphi 0, %s164
      %s182 = sphi 0, %s182
      %s184 = sphi 0, %s182
      %s185 = sphi 0, %s184
      %s199 = sphi 0, %s185
      %s203 = sphi 0, %s203
      %s205 = sphi 0, %s203
      %s206 = sphi 0, %s205
      %s220 = sphi 0, %s206
      %s228 = sphi 0, %s230
      %s231 = sphi 0, %s228
      %s232 = sphi 0, %s231
      %s248 = sphi 0, %s232
    $region4: #{tpu_custom_call.1} parent=1 // loop_header_branch
      %27 = sbr.rel (%p25) target = $region8
    $region5: #{tpu_custom_call.1} parent=1 // loop_body
      %s29 = ssub.s32 %s24, 1
      %s30 = ssub.s32 %s24, 2
      %s37 = sadd.s32 1, %s32
      %p38 = scmp.ge.s32.totalorder %s37, 1
      %s39 = scalar_select %p38, 0, %s37
      %s40 = sadd.s32 1, %s31
      %s41 = scalar_select %p38, %s40, %s31
      %p42 = scmp.ge.s32.totalorder %s41, 2
      %s43 = scalar_select %p42, 0, %s41
      %s44 = ssub.s32 %s31, %s43
      %s45 = ssub.s32 %s32, %s39
      %s46 = sor.u32 %s44, %s45
      %p47 = scmp.eq.s32.totalorder %s46, 0
      %s49 = sadd.s32 %s48, 1
      %s50 = scalar_select %p47, %s48, %s49
      %p53 = pneg %p47
      %p54 = scmp.eq.s32.totalorder %s24, 1
      %p55 = por %p53, %p54
      %p56 = scmp.ne.s32.totalorder %s48, %s51
      %p57 = scmp.eq.s32.totalorder %s24, 0
      %p58 = por %p56, %p57
      %p59 = scmp.ne.s32.totalorder %s48, %s51
      %p60 = scmp.eq.s32.totalorder %s29, 1
      %p61 = por %p59, %p60
      %p62 = scmp.ne.s32.totalorder %s51, %s52
      %p63 = scmp.eq.s32.totalorder %s29, 0
      %p64 = por %p62, %p63
      %p65 = scmp.ne.s32.totalorder %s51, %s52
      %p66 = scmp.eq.s32.totalorder %s30, 1
      %p67 = por %p65, %p66
      %p69 = scmp.ne.s32.totalorder %s52, %s68
      %p70 = scmp.eq.s32.totalorder %s30, 0
      %p71 = por %p69, %p70
      %s72 = ssub.s32 %s31, %s43
      %p73 = scmp.eq.s32.totalorder %s72, 0
      %s75 = sadd.s32 %s74, 1
      %s76 = scalar_select %p73, %s74, %s75
      %p79 = pneg %p73
      %p80 = scmp.eq.s32.totalorder %s24, 1
      %p81 = por %p79, %p80
      %p82 = scmp.ne.s32.totalorder %s74, %s77
      %p83 = scmp.eq.s32.totalorder %s24, 0
      %p84 = por %p82, %p83
      %p85 = scmp.ne.s32.totalorder %s74, %s77
      %p86 = scmp.eq.s32.totalorder %s29, 1
      %p87 = por %p85, %p86
      %p88 = scmp.ne.s32.totalorder %s77, %s78
      %p89 = scmp.eq.s32.totalorder %s29, 0
      %p90 = por %p88, %p89
      %p91 = scmp.ne.s32.totalorder %s77, %s78
      %p92 = scmp.eq.s32.totalorder %s30, 1
      %p93 = por %p91, %p92
      %p95 = scmp.ne.s32.totalorder %s78, %s94
      %p96 = scmp.eq.s32.totalorder %s30, 0
      %p97 = por %p95, %p96
      %s99 = sadd.s32 %s98, 1
      %p102 = scmp.eq.s32.totalorder %s24, 1
      %p103 = scmp.ne.s32.totalorder %s98, %s100
      %p104 = scmp.eq.s32.totalorder %s24, 0
      %p105 = por %p103, %p104
      %p106 = scmp.ne.s32.totalorder %s98, %s100
      %p107 = scmp.eq.s32.totalorder %s29, 1
      %p108 = por %p106, %p107
      %p109 = scmp.ne.s32.totalorder %s100, %s101
      %p110 = scmp.eq.s32.totalorder %s29, 0
      %p111 = por %p109, %p110
      %p112 = scmp.ne.s32.totalorder %s100, %s101
      %p113 = scmp.eq.s32.totalorder %s30, 1
      %p114 = por %p112, %p113
      %p116 = scmp.ne.s32.totalorder %s101, %s115
      %p117 = scmp.eq.s32.totalorder %s30, 0
      %p118 = por %p116, %p117
      %s120 = sadd.s32 %s119, 1
      %p123 = scmp.eq.s32.totalorder %s24, 1
      %p124 = scmp.ne.s32.totalorder %s119, %s121
      %p125 = scmp.eq.s32.totalorder %s24, 0
      %p126 = por %p124, %p125
      %p127 = scmp.ne.s32.totalorder %s119, %s121
      %p128 = scmp.eq.s32.totalorder %s29, 1
      %p129 = por %p127, %p128
      %p130 = scmp.ne.s32.totalorder %s121, %s122
      %p131 = scmp.eq.s32.totalorder %s29, 0
      %p132 = por %p130, %p131
      %p133 = scmp.ne.s32.totalorder %s121, %s122
      %p134 = scmp.eq.s32.totalorder %s30, 1
      %p135 = por %p133, %p134
      %p137 = scmp.ne.s32.totalorder %s122, %s136
      %p138 = scmp.eq.s32.totalorder %s30, 0
      %p139 = por %p137, %p138
      %s141 = sadd.s32 %s140, 1
      %p144 = scmp.eq.s32.totalorder %s24, 1
      %p145 = scmp.ne.s32.totalorder %s140, %s142
      %p146 = scmp.eq.s32.totalorder %s24, 0
      %p147 = por %p145, %p146
      %p148 = scmp.ne.s32.totalorder %s140, %s142
      %p149 = scmp.eq.s32.totalorder %s29, 1
      %p150 = por %p148, %p149
      %p151 = scmp.ne.s32.totalorder %s142, %s143
      %p152 = scmp.eq.s32.totalorder %s29, 0
      %p153 = por %p151, %p152
      %p154 = scmp.ne.s32.totalorder %s142, %s143
      %p155 = scmp.eq.s32.totalorder %s30, 1
      %p156 = por %p154, %p155
      %p158 = scmp.ne.s32.totalorder %s143, %s157
      %p159 = scmp.eq.s32.totalorder %s30, 0
      %p160 = por %p158, %p159
      %s162 = sadd.s32 %s161, 1
      %p165 = scmp.eq.s32.totalorder %s24, 1
      %p166 = scmp.ne.s32.totalorder %s161, %s163
      %p167 = scmp.eq.s32.totalorder %s24, 0
      %p168 = por %p166, %p167
      %p169 = scmp.ne.s32.totalorder %s161, %s163
      %p170 = scmp.eq.s32.totalorder %s29, 1
      %p171 = por %p169, %p170
      %p172 = scmp.ne.s32.totalorder %s163, %s164
      %p173 = scmp.eq.s32.totalorder %s29, 0
      %p174 = por %p172, %p173
      %p175 = scmp.ne.s32.totalorder %s163, %s164
      %p176 = scmp.eq.s32.totalorder %s30, 1
      %p177 = por %p175, %p176
      %p179 = scmp.ne.s32.totalorder %s164, %s178
      %p180 = scmp.eq.s32.totalorder %s30, 0
      %p181 = por %p179, %p180
      %s183 = sadd.s32 %s182, 1
      %p186 = scmp.eq.s32.totalorder %s24, 1
      %p187 = scmp.ne.s32.totalorder %s182, %s184
      %p188 = scmp.eq.s32.totalorder %s24, 0
      %p189 = por %p187, %p188
      %p190 = scmp.ne.s32.totalorder %s182, %s184
      %p191 = scmp.eq.s32.totalorder %s29, 1
      %p192 = por %p190, %p191
      %p193 = scmp.ne.s32.totalorder %s184, %s185
      %p194 = scmp.eq.s32.totalorder %s29, 0
      %p195 = por %p193, %p194
      %p196 = scmp.ne.s32.totalorder %s184, %s185
      %p197 = scmp.eq.s32.totalorder %s30, 1
      %p198 = por %p196, %p197
      %p200 = scmp.ne.s32.totalorder %s185, %s199
      %p201 = scmp.eq.s32.totalorder %s30, 0
      %p202 = por %p200, %p201
      %s204 = sadd.s32 %s203, 1
      %p207 = scmp.eq.s32.totalorder %s24, 1
      %p208 = scmp.ne.s32.totalorder %s203, %s205
      %p209 = scmp.eq.s32.totalorder %s24, 0
      %p210 = por %p208, %p209
      %p211 = scmp.ne.s32.totalorder %s203, %s205
      %p212 = scmp.eq.s32.totalorder %s29, 1
      %p213 = por %p211, %p212
      %p214 = scmp.ne.s32.totalorder %s205, %s206
      %p215 = scmp.eq.s32.totalorder %s29, 0
      %p216 = por %p214, %p215
      %p217 = scmp.ne.s32.totalorder %s205, %s206
      %p218 = scmp.eq.s32.totalorder %s30, 1
      %p219 = por %p217, %p218
      %p221 = scmp.ne.s32.totalorder %s206, %s220
      %p222 = scmp.eq.s32.totalorder %s30, 0
      %p223 = por %p221, %p222
      %s224 = ssub.s32 %s31, %s43
      %s225 = ssub.s32 %s32, %s39
      %s226 = sor.u32 %s224, %s225
      %p227 = scmp.eq.s32.totalorder %s226, 0
      %s229 = sadd.s32 %s228, 1
      %s230 = scalar_select %p227, %s228, %s229
      %p233 = pneg %p227
      %p234 = scmp.eq.s32.totalorder %s24, 1
      %p235 = por %p233, %p234
      %p236 = scmp.ne.s32.totalorder %s228, %s231
      %p237 = scmp.eq.s32.totalorder %s24, 0
      %p238 = por %p236, %p237
      %p239 = scmp.ne.s32.totalorder %s228, %s231
      %p240 = scmp.eq.s32.totalorder %s29, 1
      %p241 = por %p239, %p240
      %p242 = scmp.ne.s32.totalorder %s231, %s232
      %p243 = scmp.eq.s32.totalorder %s29, 0
      %p244 = por %p242, %p243
      %p245 = scmp.ne.s32.totalorder %s231, %s232
      %p246 = scmp.eq.s32.totalorder %s30, 1
      %p247 = por %p245, %p246
      %p249 = scmp.ne.s32.totalorder %s232, %s248
      %p250 = scmp.eq.s32.totalorder %s30, 0
      %p251 = por %p249, %p250
      %p252 = scmp.le.s32.totalorder 1, %s24
      %p253 = scmp.lt.s32.totalorder %s24, 3
      %p254 = pnand %p252, %p253
      %p255 = pneg %p254
      // Predicated region
      $region9: #{tpu_custom_call.1} parent=5 // pred_check
        _
      $region10: #{tpu_custom_call.1} parent=5 // pred_check_branch
        %257 = sbr.rel (%p254) target = $region12
      $region11: #{tpu_custom_call.1} parent=5 // pred_region
        %s258 = ssub.s32 %s24, 1
        // Predicated region
        $region13: #{tpu_custom_call.1} parent=11 // pred_check
          %p259 = pneg %p111
        $region14: #{tpu_custom_call.1} parent=11 // pred_check_branch
          %261 = sbr.rel (%p259) target = $region16
        $region15: #{tpu_custom_call.1} parent=11 // pred_region
          %s263 = ssub.s32 512, 512
          %264 = vsyncadd [#allocation6], %s263
          %s265 = sshll.u32 [#allocation7], 4
          %s266 = int_to_ptr.vmem [resolvable:$true] %s265
          %271 = dma.hbm_to_vmem [thread:$0]  %s2, 512, %s266, [#allocation6], 128, 128, 8
        $region16: #{tpu_custom_call.1} parent=11 // pred_fallthru
          _
        // Predicated region
        $region17: #{tpu_custom_call.1} parent=11 // pred_check
          %p272 = pneg %p132
        $region18: #{tpu_custom_call.1} parent=11 // pred_check_branch
          %274 = sbr.rel (%p272) target = $region20
        $region19: #{tpu_custom_call.1} parent=11 // pred_region
          _
        $region20: #{tpu_custom_call.1} parent=11 // pred_fallthru
          _
        // Predicated region
        $region21: #{tpu_custom_call.1} parent=11 // pred_check
          %p275 = pneg %p153
        $region22: #{tpu_custom_call.1} parent=11 // pred_check_branch
          %277 = sbr.rel (%p275) target = $region24
        $region23: #{tpu_custom_call.1} parent=11 // pred_region
          %s279 = ssub.s32 512, 512
          %280 = vsyncadd [#allocation9], %s279
          %s281 = sshll.u32 [#allocation8], 4
          %s282 = int_to_ptr.vmem [resolvable:$true] %s281
          %287 = dma.hbm_to_vmem [thread:$0]  %s4, 512, %s282, [#allocation9], 128, 128, 8
        $region24: #{tpu_custom_call.1} parent=11 // pred_fallthru
          _
        // Predicated region
        $region25: #{tpu_custom_call.1} parent=11 // pred_check
          %p288 = pneg %p174
        $region26: #{tpu_custom_call.1} parent=11 // pred_check_branch
          %290 = sbr.rel (%p288) target = $region28
        $region27: #{tpu_custom_call.1} parent=11 // pred_region
          _
        $region28: #{tpu_custom_call.1} parent=11 // pred_fallthru
          _
        // Predicated region
        $region29: #{tpu_custom_call.1} parent=11 // pred_check
          %p291 = pneg %p195
        $region30: #{tpu_custom_call.1} parent=11 // pred_check_branch
          %293 = sbr.rel (%p291) target = $region32
        $region31: #{tpu_custom_call.1} parent=11 // pred_region
          %s295 = ssub.s32 512, 512
          %296 = vsyncadd [#allocation9], %s295
          %s297 = sshll.u32 [#allocation10], 4
          %s298 = int_to_ptr.vmem [resolvable:$true] %s297
          %303 = dma.hbm_to_vmem [thread:$0]  %s6, 512, %s298, [#allocation9], 128, 128, 8
        $region32: #{tpu_custom_call.1} parent=11 // pred_fallthru
          _
        // Predicated region
        $region33: #{tpu_custom_call.1} parent=11 // pred_check
          %p304 = pneg %p216
        $region34: #{tpu_custom_call.1} parent=11 // pred_check_branch
          %306 = sbr.rel (%p304) target = $region36
        $region35: #{tpu_custom_call.1} parent=11 // pred_region
          _
        $region36: #{tpu_custom_call.1} parent=11 // pred_fallthru
          _
      $region12: #{tpu_custom_call.1} parent=5 // pred_fallthru
        _
      %p307 = scmp.lt.s32.totalorder %s24, 2
      // Predicated region
      $region37: #{tpu_custom_call.1} parent=5 // pred_check
        %p308 = pneg %p307
      $region38: #{tpu_custom_call.1} parent=5 // pred_check_branch
        %310 = sbr.rel (%p308) target = $region40
      $region39: #{tpu_custom_call.1} parent=5 // pred_region
        // Predicated region
        $region41: #{tpu_custom_call.1} parent=39 // pred_check
          %p311 = pneg %p58
        $region42: #{tpu_custom_call.1} parent=39 // pred_check_branch
          %313 = sbr.rel (%p311) target = $region44
        $region43: #{tpu_custom_call.1} parent=39 // pred_region
          %s314 = sand.u32 %s48, 1
          %s315 = scalar_lea.sflag [#allocation3], %s314
          %s316 = sand.u32 %s48, 1
          %s317 = smul.addr %s316, 8
          %s318 = scalar_lea.vmem [#allocation2], %s317
          %s320 = ssub.s32 128, 128
          %321 = vsyncadd %s315, %s320
          %s322 = sadd.s32 %s32, %s31
          %s323 = smul.addr %s322, 128
          %s324 = scalar_lea.hbm %s0, %s323
          %s326 = sshll.u32 %s318, 4
          %s327 = int_to_ptr.vmem [resolvable:$true] %s326
          %329 = dma.hbm_to_vmem [thread:$0]  %s324, 128, %s327, %s315
        $region44: #{tpu_custom_call.1} parent=39 // pred_fallthru
          _
        // Predicated region
        $region45: #{tpu_custom_call.1} parent=39 // pred_check
          %p330 = pneg %p84
        $region46: #{tpu_custom_call.1} parent=39 // pred_check_branch
          %332 = sbr.rel (%p330) target = $region48
        $region47: #{tpu_custom_call.1} parent=39 // pred_region
          %s333 = sand.u32 %s24, 1
          %s334 = scalar_lea.sflag [#allocation6], %s333
          %s335 = sand.u32 %s74, 1
          %s336 = smul.addr %s335, 8
          %s337 = scalar_lea.vmem [#allocation5], %s336
          %s339 = ssub.s32 128, 128
          %340 = vsyncadd %s334, %s339
          %s341 = smul.addr %s31, 128
          %s342 = scalar_lea.hbm %s1, %s341
          %s344 = sshll.u32 %s337, 4
          %s345 = int_to_ptr.vmem [resolvable:$true] %s344
          %347 = dma.hbm_to_vmem [thread:$0]  %s342, 128, %s345, %s334
        $region48: #{tpu_custom_call.1} parent=39 // pred_fallthru
          _
      $region40: #{tpu_custom_call.1} parent=5 // pred_fallthru
        _
      %p348 = scmp.le.s32.totalorder 1, %s24
      %p349 = scmp.lt.s32.totalorder %s24, 3
      %p350 = pnand %p348, %p349
      %p351 = pneg %p350
      // Predicated region
      $region49: #{tpu_custom_call.1} parent=5 // pred_check
        _
      $region50: #{tpu_custom_call.1} parent=5 // pred_check_branch
        %353 = sbr.rel (%p350) target = $region52
      $region51: #{tpu_custom_call.1} parent=5 // pred_region
        %s354 = ssub.s32 %s24, 1
        %s355 = sand.u32 %s51, 1
        %s356 = scalar_lea.sflag [#allocation3], %s355
        %s357 = sand.u32 %s51, 1
        %s358 = smul.addr %s357, 8
        %s359 = scalar_lea.vmem [#allocation2], %s358
        // Predicated region
        $region53: #{tpu_custom_call.1} parent=51 // pred_check
          %p360 = pneg %p64
        $region54: #{tpu_custom_call.1} parent=51 // pred_check_branch
          %362 = sbr.rel (%p360) target = $region56
        $region55: #{tpu_custom_call.1} parent=51 // pred_region
          %363 = dma.done %s356, 128
        $region56: #{tpu_custom_call.1} parent=51 // pred_fallthru
          _
        %s364 = sand.u32 %s29, 1
        %s365 = scalar_lea.sflag [#allocation6], %s364
        %s366 = sand.u32 %s77, 1
        %s367 = smul.addr %s366, 8
        %s368 = scalar_lea.vmem [#allocation5], %s367
        // Predicated region
        $region57: #{tpu_custom_call.1} parent=51 // pred_check
          %p369 = pneg %p90
        $region58: #{tpu_custom_call.1} parent=51 // pred_check_branch
          %371 = sbr.rel (%p369) target = $region60
        $region59: #{tpu_custom_call.1} parent=51 // pred_region
          %372 = dma.done %s365, 128
        $region60: #{tpu_custom_call.1} parent=51 // pred_fallthru
          _
        // Predicated region
        $region61: #{tpu_custom_call.1} parent=51 // pred_check
          %p373 = pneg %p111
        $region62: #{tpu_custom_call.1} parent=51 // pred_check_branch
          %375 = sbr.rel (%p373) target = $region64
        $region63: #{tpu_custom_call.1} parent=51 // pred_region
          %376 = dma.done [#allocation6], 512
        $region64: #{tpu_custom_call.1} parent=51 // pred_fallthru
          _
        // Predicated region
        $region65: #{tpu_custom_call.1} parent=51 // pred_check
          %p377 = pneg %p153
        $region66: #{tpu_custom_call.1} parent=51 // pred_check_branch
          %379 = sbr.rel (%p377) target = $region68
        $region67: #{tpu_custom_call.1} parent=51 // pred_region
          %380 = dma.done [#allocation9], 512
        $region68: #{tpu_custom_call.1} parent=51 // pred_fallthru
          _
        // Predicated region
        $region69: #{tpu_custom_call.1} parent=51 // pred_check
          %p381 = pneg %p195
        $region70: #{tpu_custom_call.1} parent=51 // pred_check_branch
          %383 = sbr.rel (%p381) target = $region72
        $region71: #{tpu_custom_call.1} parent=51 // pred_region
          %384 = dma.done [#allocation9], 512
        $region72: #{tpu_custom_call.1} parent=51 // pred_fallthru
          _
        %s385 = sand.u32 %s51, 1
        %s386 = scalar_lea.sflag [#allocation3], %s385
        %s387 = sand.u32 %s51, 1
        %s388 = smul.addr %s387, 8
        %s389 = scalar_lea.vmem [#allocation2], %s388
        %p390 = pneg %p64
        %p391 = pneg %p61
        %s392 = sand.u32 %s29, 1
        %s393 = scalar_lea.sflag [#allocation6], %s392
        %s394 = sand.u32 %s77, 1
        %s395 = smul.addr %s394, 8
        %s396 = scalar_lea.vmem [#allocation5], %s395
        %p397 = pneg %p90
        %p398 = pneg %p87
        %p399 = pneg %p111
        %p400 = pneg %p108
        %p401 = pneg %p132
        %p402 = pneg %p129
        %p403 = pneg %p153
        %p404 = pneg %p150
        %p405 = pneg %p174
        %p406 = pneg %p171
        %p407 = pneg %p195
        %p408 = pneg %p192
        %p409 = pneg %p216
        %p410 = pneg %p213
        %p411 = pneg %p244
        %p412 = pneg %p241
        %s413 = sand.u32 %s231, 1
        %s414 = scalar_lea.sflag [#allocation4], %s413
        %s415 = sand.u32 %s231, 1
        %s416 = smul.addr %s415, 8
        %s417 = scalar_lea.vmem [#allocation11], %s416
        %v418 = vld [vmem:[%s359] sm:$0xff]
        %v419 = vld [vmem:[%s368] sm:$0xff]
        %v420 = vld [vmem:[#allocation7] sm:$0xff]
        %v421 = vld [vmem:[#allocation7 + $0x8] sm:$0xff]
        %v422 = vld [vmem:[#allocation7 + $0x10] sm:$0xff]
        %v423 = vld [vmem:[#allocation7 + $0x18] sm:$0xff]
        %v424 = vld [vmem:[%s3] sm:$0x1]
        %v426 = vlaneseq
        %v427 = vshrl.u32 %v426, 7
        %v428 = vsub.s32 0, %v427
        %v429 = vrot.slane %v424, %v428
        %vm431 = vcmask 261120
        %v433 = vsel %vm431, %v418, 0
        %435 = vmatprep.subr.mxu0 0.0
        %436 = vmatpush1.msra.mxu0 %v420
        %437 = vmatprep.subr.mxu0 0.0
        %438 = vmatpush1.msra.mxu0 %v421
        %439 = vmatprep.subr.mxu0 0.0
        %440 = vmatpush1.msra.mxu0 %v422
        %441 = vmatprep.subr.mxu0 0.0
        %442 = vmatpush1.msra.mxu0 %v423
        %443 = vmatprep.subr.mxu0 0.0
        %444 = vmatpush1.msra.mxu0 0.0
        %445 = vmatprep.subr.mxu0 0.0
        %446 = vmatpush1.msra.mxu0 0.0
        %447 = vmatprep.subr.mxu0 0.0
        %448 = vmatpush1.msra.mxu0 0.0
        %449 = vmatprep.subr.mxu0 0.0
        %450 = vmatpush1.msra.mxu0 0.0
        %451 = vmatprep.subr.mxu0 0.0
        %452 = vmatpush1.msra.mxu0 0.0
        %453 = vmatprep.subr.mxu0 0.0
        %454 = vmatpush1.msra.mxu0 0.0
        %455 = vmatprep.subr.mxu0 0.0
        %456 = vmatpush1.msra.mxu0 0.0
        %457 = vmatprep.subr.mxu0 0.0
        %458 = vmatpush1.msra.mxu0 0.0
        %459 = vmatprep.subr.mxu0 0.0
        %460 = vmatpush1.msra.mxu0 0.0
        %461 = vmatprep.subr.mxu0 0.0
        %462 = vmatpush1.msra.mxu0 0.0
        %463 = vmatprep.subr.mxu0 0.0
        %464 = vmatpush1.msra.mxu0 0.0
        %465 = vmatprep.subr.mxu0 0.0
        %466 = vmatpush1.msra.mxu0 0.0
        %467 = vmatprep.subr.mxu0 0.0
        %468 = vmatpush1.msra.mxu0 0.0
        %469 = vmatprep.subr.mxu0 0.0
        %470 = vmatpush1.msra.mxu0 0.0
        %471 = vmatprep.subr.mxu0 0.0
        %472 = vmatpush1.msra.mxu0 0.0
        %473 = vmatprep.subr.mxu0 0.0
        %474 = vmatpush1.msra.mxu0 0.0
        %475 = vmatprep.subr.mxu0 0.0
        %476 = vmatpush1.msra.mxu0 0.0
        %477 = vmatprep.subr.mxu0 0.0
        %478 = vmatpush1.msra.mxu0 0.0
        %479 = vmatprep.subr.mxu0 0.0
        %480 = vmatpush1.msra.mxu0 0.0
        %481 = vmatprep.subr.mxu0 0.0
        %482 = vmatpush1.msra.mxu0 0.0
        %483 = vmatprep.subr.mxu0 0.0
        %484 = vmatpush1.msra.mxu0 0.0
        %485 = vmatprep.subr.mxu0 0.0
        %486 = vmatpush1.msra.mxu0 0.0
        %487 = vmatprep.subr.mxu0 0.0
        %488 = vmatpush1.msra.mxu0 0.0
        %489 = vmatprep.subr.mxu0 0.0
        %490 = vmatpush1.msra.mxu0 0.0
        %491 = vmatprep.subr.mxu0 0.0
        %492 = vmatpush1.msra.mxu0 0.0
        %493 = vmatprep.subr.mxu0 0.0
        %494 = vmatpush1.msra.mxu0 0.0
        %495 = vmatprep.subr.mxu0 0.0
        %496 = vmatpush1.msra.mxu0 0.0
        %497 = vmatprep.subr.mxu0 0.0
        %498 = vmatpush1.msra.mxu0 0.0
        %499 = vmatprep.mubr.f32.mxu0 0.0
        %500 = vmatmul.mubr.f32.gmra.mrb[0].mxu0 %v433
        %v501 = vpop.f32.mrb[0].mxu0
        %v502 = vadd.f32 %v429, %v501
        %v503 = vpop.f32.mrb[0].mxu0
        %504 = vdwg.mxu0
        %v505 = vmul.f32 %v502, 0.25
        %v506 = vld [vmem:[#allocation8] sm:$0xff]
        %v507 = vld [vmem:[#allocation8 + $0x8] sm:$0xff]
        %v508 = vld [vmem:[#allocation8 + $0x10] sm:$0xff]
        %v509 = vld [vmem:[#allocation8 + $0x18] sm:$0xff]
        %v510 = vld [vmem:[%s5] sm:$0x1]
        %v512 = vlaneseq
        %v513 = vshrl.u32 %v512, 7
        %v514 = vsub.s32 0, %v513
        %v515 = vrot.slane %v510, %v514
        %v518 = vsel %vm431, %v419, 0
        %520 = vmatprep.subr.mxu0 0.0
        %521 = vmatpush1.msra.mxu0 %v506
        %522 = vmatprep.subr.mxu0 0.0
        %523 = vmatpush1.msra.mxu0 %v507
        %524 = vmatprep.subr.mxu0 0.0
        %525 = vmatpush1.msra.mxu0 %v508
        %526 = vmatprep.subr.mxu0 0.0
        %527 = vmatpush1.msra.mxu0 %v509
        %528 = vmatprep.subr.mxu0 0.0
        %529 = vmatpush1.msra.mxu0 0.0
        %530 = vmatprep.subr.mxu0 0.0
        %531 = vmatpush1.msra.mxu0 0.0
        %532 = vmatprep.subr.mxu0 0.0
        %533 = vmatpush1.msra.mxu0 0.0
        %534 = vmatprep.subr.mxu0 0.0
        %535 = vmatpush1.msra.mxu0 0.0
        %536 = vmatprep.subr.mxu0 0.0
        %537 = vmatpush1.msra.mxu0 0.0
        %538 = vmatprep.subr.mxu0 0.0
        %539 = vmatpush1.msra.mxu0 0.0
        %540 = vmatprep.subr.mxu0 0.0
        %541 = vmatpush1.msra.mxu0 0.0
        %542 = vmatprep.subr.mxu0 0.0
        %543 = vmatpush1.msra.mxu0 0.0
        %544 = vmatprep.subr.mxu0 0.0
        %545 = vmatpush1.msra.mxu0 0.0
        %546 = vmatprep.subr.mxu0 0.0
        %547 = vmatpush1.msra.mxu0 0.0
        %548 = vmatprep.subr.mxu0 0.0
        %549 = vmatpush1.msra.mxu0 0.0
        %550 = vmatprep.subr.mxu0 0.0
        %551 = vmatpush1.msra.mxu0 0.0
        %552 = vmatprep.subr.mxu0 0.0
        %553 = vmatpush1.msra.mxu0 0.0
        %554 = vmatprep.subr.mxu0 0.0
        %555 = vmatpush1.msra.mxu0 0.0
        %556 = vmatprep.subr.mxu0 0.0
        %557 = vmatpush1.msra.mxu0 0.0
        %558 = vmatprep.subr.mxu0 0.0
        %559 = vmatpush1.msra.mxu0 0.0
        %560 = vmatprep.subr.mxu0 0.0
        %561 = vmatpush1.msra.mxu0 0.0
        %562 = vmatprep.subr.mxu0 0.0
        %563 = vmatpush1.msra.mxu0 0.0
        %564 = vmatprep.subr.mxu0 0.0
        %565 = vmatpush1.msra.mxu0 0.0
        %566 = vmatprep.subr.mxu0 0.0
        %567 = vmatpush1.msra.mxu0 0.0
        %568 = vmatprep.subr.mxu0 0.0
        %569 = vmatpush1.msra.mxu0 0.0
        %570 = vmatprep.subr.mxu0 0.0
        %571 = vmatpush1.msra.mxu0 0.0
        %572 = vmatprep.subr.mxu0 0.0
        %573 = vmatpush1.msra.mxu0 0.0
        %574 = vmatprep.subr.mxu0 0.0
        %575 = vmatpush1.msra.mxu0 0.0
        %576 = vmatprep.subr.mxu0 0.0
        %577 = vmatpush1.msra.mxu0 0.0
        %578 = vmatprep.subr.mxu0 0.0
        %579 = vmatpush1.msra.mxu0 0.0
        %580 = vmatprep.subr.mxu0 0.0
        %581 = vmatpush1.msra.mxu0 0.0
        %582 = vmatprep.subr.mxu0 0.0
        %583 = vmatpush1.msra.mxu0 0.0
        %584 = vmatprep.mubr.f32.mxu0 0.0
        %585 = vmatmul.mubr.f32.gmra.mrb[0].mxu0 %v518
        %v586 = vpop.f32.mrb[0].mxu0
        %v587 = vadd.f32 %v515, %v586
        %v588 = vpop.f32.mrb[0].mxu0
        %589 = vdwg.mxu0
        %vm590 = vcmask 64512
        %v592 = vsel %vm590, %v505, 0
        %v595 = vsel %vm590, %v587, 0
        %597 = vmatprep.subr.mxu0 0.0
        %598 = vmatpush1.xpose.msra.mxu0 %v595
        %599 = vmatprep.subr.mxu0 0.0
        %600 = vmatpush1.xpose.msra.mxu0 0.0
        %601 = vmatprep.subr.mxu0 0.0
        %602 = vmatpush1.xpose.msra.mxu0 0.0
        %603 = vmatprep.subr.mxu0 0.0
        %604 = vmatpush1.xpose.msra.mxu0 0.0
        %605 = vmatprep.subr.mxu0 0.0
        %606 = vmatpush1.xpose.msra.mxu0 0.0
        %607 = vmatprep.subr.mxu0 0.0
        %608 = vmatpush1.xpose.msra.mxu0 0.0
        %609 = vmatprep.subr.mxu0 0.0
        %610 = vmatpush1.xpose.msra.mxu0 0.0
        %611 = vmatprep.subr.mxu0 0.0
        %612 = vmatpush1.xpose.msra.mxu0 0.0
        %613 = vmatprep.subr.mxu0 0.0
        %614 = vmatpush1.xpose.msra.mxu0 0.0
        %615 = vmatprep.subr.mxu0 0.0
        %616 = vmatpush1.xpose.msra.mxu0 0.0
        %617 = vmatprep.subr.mxu0 0.0
        %618 = vmatpush1.xpose.msra.mxu0 0.0
        %619 = vmatprep.subr.mxu0 0.0
        %620 = vmatpush1.xpose.msra.mxu0 0.0
        %621 = vmatprep.subr.mxu0 0.0
        %622 = vmatpush1.xpose.msra.mxu0 0.0
        %623 = vmatprep.subr.mxu0 0.0
        %624 = vmatpush1.xpose.msra.mxu0 0.0
        %625 = vmatprep.subr.mxu0 0.0
        %626 = vmatpush1.xpose.msra.mxu0 0.0
        %627 = vmatprep.subr.mxu0 0.0
        %628 = vmatpush1.xpose.msra.mxu0 0.0
        %629 = vmatprep.subr.mxu0 0.0
        %630 = vmatpush1.xpose.msra.mxu0 0.0
        %631 = vmatprep.subr.mxu0 0.0
        %632 = vmatpush1.xpose.msra.mxu0 0.0
        %633 = vmatprep.subr.mxu0 0.0
        %634 = vmatpush1.xpose.msra.mxu0 0.0
        %635 = vmatprep.subr.mxu0 0.0
        %636 = vmatpush1.xpose.msra.mxu0 0.0
        %637 = vmatprep.subr.mxu0 0.0
        %638 = vmatpush1.xpose.msra.mxu0 0.0
        %639 = vmatprep.subr.mxu0 0.0
        %640 = vmatpush1.xpose.msra.mxu0 0.0
        %641 = vmatprep.subr.mxu0 0.0
        %642 = vmatpush1.xpose.msra.mxu0 0.0
        %643 = vmatprep.subr.mxu0 0.0
        %644 = vmatpush1.xpose.msra.mxu0 0.0
        %645 = vmatprep.subr.mxu0 0.0
        %646 = vmatpush1.xpose.msra.mxu0 0.0
        %647 = vmatprep.subr.mxu0 0.0
        %648 = vmatpush1.xpose.msra.mxu0 0.0
        %649 = vmatprep.subr.mxu0 0.0
        %650 = vmatpush1.xpose.msra.mxu0 0.0
        %651 = vmatprep.subr.mxu0 0.0
        %652 = vmatpush1.xpose.msra.mxu0 0.0
        %653 = vmatprep.subr.mxu0 0.0
        %654 = vmatpush1.xpose.msra.mxu0 0.0
        %655 = vmatprep.subr.mxu0 0.0
        %656 = vmatpush1.xpose.msra.mxu0 0.0
        %657 = vmatprep.subr.mxu0 0.0
        %658 = vmatpush1.xpose.msra.mxu0 0.0
        %659 = vmatprep.subr.mxu0 0.0
        %660 = vmatpush1.xpose.msra.mxu0 0.0
        %661 = vmatprep.mubr.f32.mxu0 0.0
        %662 = vmatmul.mubr.f32.gmra.mrb[0].mxu0 %v592
        %v663 = vpop.f32.mrb[0].mxu0
        %v664 = vadd.f32 0.0, %v663
        %v665 = vpop.f32.mrb[0].mxu0
        %666 = vdwg.mxu0
        %v667 = vsel %vm590, %v664, -inf
        %668 = vmax.xlane.f32.xlu0 %v667
        %v669 = vpop.xlane.xlu0 %668
        %v670 = vsub.f32 %v664, %v669
        %v671 = vmul.f32 %v670, 1.442695
        %v672 = vpow.pop %v671
        %v673 = vsel %vm590, %v672, 0.0
        %674 = vadd.xlane.f32.xlu0 %v673
        %v675 = vpop.xlane.xlu0 %674
        %676 = vrot.lane.b32.xlu0 %v587, 96
        %v677 = vpop.permute.xlu0 %676
        %v680 = vsel %vm590, %v672, 0
        %682 = vmatprep.subr.mxu0 0.0
        %683 = vmatpush1.msra.mxu0 %v677
        %684 = vmatprep.subr.mxu0 0.0
        %685 = vmatpush1.msra.mxu0 0.0
        %686 = vmatprep.subr.mxu0 0.0
        %687 = vmatpush1.msra.mxu0 0.0
        %688 = vmatprep.subr.mxu0 0.0
        %689 = vmatpush1.msra.mxu0 0.0
        %690 = vmatprep.subr.mxu0 0.0
        %691 = vmatpush1.msra.mxu0 0.0
        %692 = vmatprep.subr.mxu0 0.0
        %693 = vmatpush1.msra.mxu0 0.0
        %694 = vmatprep.subr.mxu0 0.0
        %695 = vmatpush1.msra.mxu0 0.0
        %696 = vmatprep.subr.mxu0 0.0
        %697 = vmatpush1.msra.mxu0 0.0
        %698 = vmatprep.subr.mxu0 0.0
        %699 = vmatpush1.msra.mxu0 0.0
        %700 = vmatprep.subr.mxu0 0.0
        %701 = vmatpush1.msra.mxu0 0.0
        %702 = vmatprep.subr.mxu0 0.0
        %703 = vmatpush1.msra.mxu0 0.0
        %704 = vmatprep.subr.mxu0 0.0
        %705 = vmatpush1.msra.mxu0 0.0
        %706 = vmatprep.subr.mxu0 0.0
        %707 = vmatpush1.msra.mxu0 0.0
        %708 = vmatprep.subr.mxu0 0.0
        %709 = vmatpush1.msra.mxu0 0.0
        %710 = vmatprep.subr.mxu0 0.0
        %711 = vmatpush1.msra.mxu0 0.0
        %712 = vmatprep.subr.mxu0 0.0
        %713 = vmatpush1.msra.mxu0 0.0
        %714 = vmatprep.subr.mxu0 0.0
        %715 = vmatpush1.msra.mxu0 0.0
        %716 = vmatprep.subr.mxu0 0.0
        %717 = vmatpush1.msra.mxu0 0.0
        %718 = vmatprep.subr.mxu0 0.0
        %719 = vmatpush1.msra.mxu0 0.0
        %720 = vmatprep.subr.mxu0 0.0
        %721 = vmatpush1.msra.mxu0 0.0
        %722 = vmatprep.subr.mxu0 0.0
        %723 = vmatpush1.msra.mxu0 0.0
        %724 = vmatprep.subr.mxu0 0.0
        %725 = vmatpush1.msra.mxu0 0.0
        %726 = vmatprep.subr.mxu0 0.0
        %727 = vmatpush1.msra.mxu0 0.0
        %728 = vmatprep.subr.mxu0 0.0
        %729 = vmatpush1.msra.mxu0 0.0
        %730 = vmatprep.subr.mxu0 0.0
        %731 = vmatpush1.msra.mxu0 0.0
        %732 = vmatprep.subr.mxu0 0.0
        %733 = vmatpush1.msra.mxu0 0.0
        %734 = vmatprep.subr.mxu0 0.0
        %735 = vmatpush1.msra.mxu0 0.0
        %736 = vmatprep.subr.mxu0 0.0
        %737 = vmatpush1.msra.mxu0 0.0
        %738 = vmatprep.subr.mxu0 0.0
        %739 = vmatpush1.msra.mxu0 0.0
        %740 = vmatprep.subr.mxu0 0.0
        %741 = vmatpush1.msra.mxu0 0.0
        %742 = vmatprep.subr.mxu0 0.0
        %743 = vmatpush1.msra.mxu0 0.0
        %744 = vmatprep.subr.mxu0 0.0
        %745 = vmatpush1.msra.mxu0 0.0
        %746 = vmatprep.mubr.f32.mxu0 0.0
        %747 = vmatmul.mubr.f32.gmra.mrb[0].mxu0 %v680
        %v748 = vpop.f32.mrb[0].mxu0
        %v749 = vadd.f32 0.0, %v748
        %v750 = vpop.f32.mrb[0].mxu0
        %751 = vdwg.mxu0
        %v752 = vrcp.pop %v675
        %v753 = vmul.f32 %v749, %v752
        %754 = vrot.lane.b32.xlu0 %v505, 120
        %v755 = vpop.permute.xlu0 %754
        %756 = vrot.lane.b32.xlu0 %v587, 120
        %v757 = vpop.permute.xlu0 %756
        %v758 = vsel %vm590, %v755, 0
        %v760 = vsel %vm590, %v757, 0
        %762 = vmatprep.subr.mxu0 0.0
        %763 = vmatpush1.xpose.msra.mxu0 %v760
        %764 = vmatprep.subr.mxu0 0.0
        %765 = vmatpush1.xpose.msra.mxu0 0.0
        %766 = vmatprep.subr.mxu0 0.0
        %767 = vmatpush1.xpose.msra.mxu0 0.0
        %768 = vmatprep.subr.mxu0 0.0
        %769 = vmatpush1.xpose.msra.mxu0 0.0
        %770 = vmatprep.subr.mxu0 0.0
        %771 = vmatpush1.xpose.msra.mxu0 0.0
        %772 = vmatprep.subr.mxu0 0.0
        %773 = vmatpush1.xpose.msra.mxu0 0.0
        %774 = vmatprep.subr.mxu0 0.0
        %775 = vmatpush1.xpose.msra.mxu0 0.0
        %776 = vmatprep.subr.mxu0 0.0
        %777 = vmatpush1.xpose.msra.mxu0 0.0
        %778 = vmatprep.subr.mxu0 0.0
        %779 = vmatpush1.xpose.msra.mxu0 0.0
        %780 = vmatprep.subr.mxu0 0.0
        %781 = vmatpush1.xpose.msra.mxu0 0.0
        %782 = vmatprep.subr.mxu0 0.0
        %783 = vmatpush1.xpose.msra.mxu0 0.0
        %784 = vmatprep.subr.mxu0 0.0
        %785 = vmatpush1.xpose.msra.mxu0 0.0
        %786 = vmatprep.subr.mxu0 0.0
        %787 = vmatpush1.xpose.msra.mxu0 0.0
        %788 = vmatprep.subr.mxu0 0.0
        %789 = vmatpush1.xpose.msra.mxu0 0.0
        %790 = vmatprep.subr.mxu0 0.0
        %791 = vmatpush1.xpose.msra.mxu0 0.0
        %792 = vmatprep.subr.mxu0 0.0
        %793 = vmatpush1.xpose.msra.mxu0 0.0
        %794 = vmatprep.subr.mxu0 0.0
        %795 = vmatpush1.xpose.msra.mxu0 0.0
        %796 = vmatprep.subr.mxu0 0.0
        %797 = vmatpush1.xpose.msra.mxu0 0.0
        %798 = vmatprep.subr.mxu0 0.0
        %799 = vmatpush1.xpose.msra.mxu0 0.0
        %800 = vmatprep.subr.mxu0 0.0
        %801 = vmatpush1.xpose.msra.mxu0 0.0
        %802 = vmatprep.subr.mxu0 0.0
        %803 = vmatpush1.xpose.msra.mxu0 0.0
        %804 = vmatprep.subr.mxu0 0.0
        %805 = vmatpush1.xpose.msra.mxu0 0.0
        %806 = vmatprep.subr.mxu0 0.0
        %807 = vmatpush1.xpose.msra.mxu0 0.0
        %808 = vmatprep.subr.mxu0 0.0
        %809 = vmatpush1.xpose.msra.mxu0 0.0
        %810 = vmatprep.subr.mxu0 0.0
        %811 = vmatpush1.xpose.msra.mxu0 0.0
        %812 = vmatprep.subr.mxu0 0.0
        %813 = vmatpush1.xpose.msra.mxu0 0.0
        %814 = vmatprep.subr.mxu0 0.0
        %815 = vmatpush1.xpose.msra.mxu0 0.0
        %816 = vmatprep.subr.mxu0 0.0
        %817 = vmatpush1.xpose.msra.mxu0 0.0
        %818 = vmatprep.subr.mxu0 0.0
        %819 = vmatpush1.xpose.msra.mxu0 0.0
        %820 = vmatprep.subr.mxu0 0.0
        %821 = vmatpush1.xpose.msra.mxu0 0.0
        %822 = vmatprep.subr.mxu0 0.0
        %823 = vmatpush1.xpose.msra.mxu0 0.0
        %824 = vmatprep.subr.mxu0 0.0
        %825 = vmatpush1.xpose.msra.mxu0 0.0
        %826 = vmatprep.mubr.f32.mxu0 0.0
        %827 = vmatmul.mubr.f32.gmra.mrb[0].mxu0 %v758
        %v828 = vpop.f32.mrb[0].mxu0
        %v829 = vadd.f32 0.0, %v828
        %v830 = vpop.f32.mrb[0].mxu0
        %831 = vdwg.mxu0
        %v832 = vsel %vm590, %v829, -inf
        %833 = vmax.xlane.f32.xlu0 %v832
        %v834 = vpop.xlane.xlu0 %833
        %v835 = vsub.f32 %v829, %v834
        %v836 = vmul.f32 %v835, 1.442695
        %v837 = vpow.pop %v836
        %v838 = vsel %vm590, %v837, 0.0
        %839 = vadd.xlane.f32.xlu0 %v838
        %v840 = vpop.xlane.xlu0 %839
        %841 = vrot.lane.b32.xlu0 %v587, 88
        %v842 = vpop.permute.xlu0 %841
        %v845 = vsel %vm590, %v837, 0
        %847 = vmatprep.subr.mxu0 0.0
        %848 = vmatpush1.msra.mxu0 %v842
        %849 = vmatprep.subr.mxu0 0.0
        %850 = vmatpush1.msra.mxu0 0.0
        %851 = vmatprep.subr.mxu0 0.0
        %852 = vmatpush1.msra.mxu0 0.0
        %853 = vmatprep.subr.mxu0 0.0
        %854 = vmatpush1.msra.mxu0 0.0
        %855 = vmatprep.subr.mxu0 0.0
        %856 = vmatpush1.msra.mxu0 0.0
        %857 = vmatprep.subr.mxu0 0.0
        %858 = vmatpush1.msra.mxu0 0.0
        %859 = vmatprep.subr.mxu0 0.0
        %860 = vmatpush1.msra.mxu0 0.0
        %861 = vmatprep.subr.mxu0 0.0
        %862 = vmatpush1.msra.mxu0 0.0
        %863 = vmatprep.subr.mxu0 0.0
        %864 = vmatpush1.msra.mxu0 0.0
        %865 = vmatprep.subr.mxu0 0.0
        %866 = vmatpush1.msra.mxu0 0.0
        %867 = vmatprep.subr.mxu0 0.0
        %868 = vmatpush1.msra.mxu0 0.0
        %869 = vmatprep.subr.mxu0 0.0
        %870 = vmatpush1.msra.mxu0 0.0
        %871 = vmatprep.subr.mxu0 0.0
        %872 = vmatpush1.msra.mxu0 0.0
        %873 = vmatprep.subr.mxu0 0.0
        %874 = vmatpush1.msra.mxu0 0.0
        %875 = vmatprep.subr.mxu0 0.0
        %876 = vmatpush1.msra.mxu0 0.0
        %877 = vmatprep.subr.mxu0 0.0
        %878 = vmatpush1.msra.mxu0 0.0
        %879 = vmatprep.subr.mxu0 0.0
        %880 = vmatpush1.msra.mxu0 0.0
        %881 = vmatprep.subr.mxu0 0.0
        %882 = vmatpush1.msra.mxu0 0.0
        %883 = vmatprep.subr.mxu0 0.0
        %884 = vmatpush1.msra.mxu0 0.0
        %885 = vmatprep.subr.mxu0 0.0
        %886 = vmatpush1.msra.mxu0 0.0
        %887 = vmatprep.subr.mxu0 0.0
        %888 = vmatpush1.msra.mxu0 0.0
        %889 = vmatprep.subr.mxu0 0.0
        %890 = vmatpush1.msra.mxu0 0.0
        %891 = vmatprep.subr.mxu0 0.0
        %892 = vmatpush1.msra.mxu0 0.0
        %893 = vmatprep.subr.mxu0 0.0
        %894 = vmatpush1.msra.mxu0 0.0
        %895 = vmatprep.subr.mxu0 0.0
        %896 = vmatpush1.msra.mxu0 0.0
        %897 = vmatprep.subr.mxu0 0.0
        %898 = vmatpush1.msra.mxu0 0.0
        %899 = vmatprep.subr.mxu0 0.0
        %900 = vmatpush1.msra.mxu0 0.0
        %901 = vmatprep.subr.mxu0 0.0
        %902 = vmatpush1.msra.mxu0 0.0
        %903 = vmatprep.subr.mxu0 0.0
        %904 = vmatpush1.msra.mxu0 0.0
        %905 = vmatprep.subr.mxu0 0.0
        %906 = vmatpush1.msra.mxu0 0.0
        %907 = vmatprep.subr.mxu0 0.0
        %908 = vmatpush1.msra.mxu0 0.0
        %909 = vmatprep.subr.mxu0 0.0
        %910 = vmatpush1.msra.mxu0 0.0
        %911 = vmatprep.mubr.f32.mxu0 0.0
        %912 = vmatmul.mubr.f32.gmra.mrb[0].mxu0 %v845
        %v913 = vpop.f32.mrb[0].mxu0
        %v914 = vadd.f32 0.0, %v913
        %v915 = vpop.f32.mrb[0].mxu0
        %916 = vdwg.mxu0
        %v917 = vrcp.pop %v840
        %v918 = vmul.f32 %v914, %v917
        %919 = vrot.lane.b32.xlu0 %v505, 112
        %v920 = vpop.permute.xlu0 %919
        %921 = vrot.lane.b32.xlu0 %v587, 112
        %v922 = vpop.permute.xlu0 %921
        %v923 = vsel %vm590, %v920, 0
        %v925 = vsel %vm590, %v922, 0
        %927 = vmatprep.subr.mxu0 0.0
        %928 = vmatpush1.xpose.msra.mxu0 %v925
        %929 = vmatprep.subr.mxu0 0.0
        %930 = vmatpush1.xpose.msra.mxu0 0.0
        %931 = vmatprep.subr.mxu0 0.0
        %932 = vmatpush1.xpose.msra.mxu0 0.0
        %933 = vmatprep.subr.mxu0 0.0
        %934 = vmatpush1.xpose.msra.mxu0 0.0
        %935 = vmatprep.subr.mxu0 0.0
        %936 = vmatpush1.xpose.msra.mxu0 0.0
        %937 = vmatprep.subr.mxu0 0.0
        %938 = vmatpush1.xpose.msra.mxu0 0.0
        %939 = vmatprep.subr.mxu0 0.0
        %940 = vmatpush1.xpose.msra.mxu0 0.0
        %941 = vmatprep.subr.mxu0 0.0
        %942 = vmatpush1.xpose.msra.mxu0 0.0
        %943 = vmatprep.subr.mxu0 0.0
        %944 = vmatpush1.xpose.msra.mxu0 0.0
        %945 = vmatprep.subr.mxu0 0.0
        %946 = vmatpush1.xpose.msra.mxu0 0.0
        %947 = vmatprep.subr.mxu0 0.0
        %948 = vmatpush1.xpose.msra.mxu0 0.0
        %949 = vmatprep.subr.mxu0 0.0
        %950 = vmatpush1.xpose.msra.mxu0 0.0
        %951 = vmatprep.subr.mxu0 0.0
        %952 = vmatpush1.xpose.msra.mxu0 0.0
        %953 = vmatprep.subr.mxu0 0.0
        %954 = vmatpush1.xpose.msra.mxu0 0.0
        %955 = vmatprep.subr.mxu0 0.0
        %956 = vmatpush1.xpose.msra.mxu0 0.0
        %957 = vmatprep.subr.mxu0 0.0
        %958 = vmatpush1.xpose.msra.mxu0 0.0
        %959 = vmatprep.subr.mxu0 0.0
        %960 = vmatpush1.xpose.msra.mxu0 0.0
        %961 = vmatprep.subr.mxu0 0.0
        %962 = vmatpush1.xpose.msra.mxu0 0.0
        %963 = vmatprep.subr.mxu0 0.0
        %964 = vmatpush1.xpose.msra.mxu0 0.0
        %965 = vmatprep.subr.mxu0 0.0
        %966 = vmatpush1.xpose.msra.mxu0 0.0
        %967 = vmatprep.subr.mxu0 0.0
        %968 = vmatpush1.xpose.msra.mxu0 0.0
        %969 = vmatprep.subr.mxu0 0.0
        %970 = vmatpush1.xpose.msra.mxu0 0.0
        %971 = vmatprep.subr.mxu0 0.0
        %972 = vmatpush1.xpose.msra.mxu0 0.0
        %973 = vmatprep.subr.mxu0 0.0
        %974 = vmatpush1.xpose.msra.mxu0 0.0
        %975 = vmatprep.subr.mxu0 0.0
        %976 = vmatpush1.xpose.msra.mxu0 0.0
        %977 = vmatprep.subr.mxu0 0.0
        %978 = vmatpush1.xpose.msra.mxu0 0.0
        %979 = vmatprep.subr.mxu0 0.0
        %980 = vmatpush1.xpose.msra.mxu0 0.0
        %981 = vmatprep.subr.mxu0 0.0
        %982 = vmatpush1.xpose.msra.mxu0 0.0
        %983 = vmatprep.subr.mxu0 0.0
        %984 = vmatpush1.xpose.msra.mxu0 0.0
        %985 = vmatprep.subr.mxu0 0.0
        %986 = vmatpush1.xpose.msra.mxu0 0.0
        %987 = vmatprep.subr.mxu0 0.0
        %988 = vmatpush1.xpose.msra.mxu0 0.0
        %989 = vmatprep.subr.mxu0 0.0
        %990 = vmatpush1.xpose.msra.mxu0 0.0
        %991 = vmatprep.mubr.f32.mxu0 0.0
        %992 = vmatmul.mubr.f32.gmra.mrb[0].mxu0 %v923
        %v993 = vpop.f32.mrb[0].mxu0
        %v994 = vadd.f32 0.0, %v993
        %v995 = vpop.f32.mrb[0].mxu0
        %996 = vdwg.mxu0
        %v997 = vsel %vm590, %v994, -inf
        %998 = vmax.xlane.f32.xlu0 %v997
        %v999 = vpop.xlane.xlu0 %998
        %v1000 = vsub.f32 %v994, %v999
        %v1001 = vmul.f32 %v1000, 1.442695
        %v1002 = vpow.pop %v1001
        %v1003 = vsel %vm590, %v1002, 0.0
        %1004 = vadd.xlane.f32.xlu0 %v1003
        %v1005 = vpop.xlane.xlu0 %1004
        %1006 = vrot.lane.b32.xlu0 %v587, 80
        %v1007 = vpop.permute.xlu0 %1006
        %v1010 = vsel %vm590, %v1002, 0
        %1012 = vmatprep.subr.mxu0 0.0
        %1013 = vmatpush1.msra.mxu0 %v1007
        %1014 = vmatprep.subr.mxu0 0.0
        %1015 = vmatpush1.msra.mxu0 0.0
        %1016 = vmatprep.subr.mxu0 0.0
        %1017 = vmatpush1.msra.mxu0 0.0
        %1018 = vmatprep.subr.mxu0 0.0
        %1019 = vmatpush1.msra.mxu0 0.0
        %1020 = vmatprep.subr.mxu0 0.0
        %1021 = vmatpush1.msra.mxu0 0.0
        %1022 = vmatprep.subr.mxu0 0.0
        %1023 = vmatpush1.msra.mxu0 0.0
        %1024 = vmatprep.subr.mxu0 0.0
        %1025 = vmatpush1.msra.mxu0 0.0
        %1026 = vmatprep.subr.mxu0 0.0
        %1027 = vmatpush1.msra.mxu0 0.0
        %1028 = vmatprep.subr.mxu0 0.0
        %1029 = vmatpush1.msra.mxu0 0.0
        %1030 = vmatprep.subr.mxu0 0.0
        %1031 = vmatpush1.msra.mxu0 0.0
        %1032 = vmatprep.subr.mxu0 0.0
        %1033 = vmatpush1.msra.mxu0 0.0
        %1034 = vmatprep.subr.mxu0 0.0
        %1035 = vmatpush1.msra.mxu0 0.0
        %1036 = vmatprep.subr.mxu0 0.0
        %1037 = vmatpush1.msra.mxu0 0.0
        %1038 = vmatprep.subr.mxu0 0.0
        %1039 = vmatpush1.msra.mxu0 0.0
        %1040 = vmatprep.subr.mxu0 0.0
        %1041 = vmatpush1.msra.mxu0 0.0
        %1042 = vmatprep.subr.mxu0 0.0
        %1043 = vmatpush1.msra.mxu0 0.0
        %1044 = vmatprep.subr.mxu0 0.0
        %1045 = vmatpush1.msra.mxu0 0.0
        %1046 = vmatprep.subr.mxu0 0.0
        %1047 = vmatpush1.msra.mxu0 0.0
        %1048 = vmatprep.subr.mxu0 0.0
        %1049 = vmatpush1.msra.mxu0 0.0
        %1050 = vmatprep.subr.mxu0 0.0
        %1051 = vmatpush1.msra.mxu0 0.0
        %1052 = vmatprep.subr.mxu0 0.0
        %1053 = vmatpush1.msra.mxu0 0.0
        %1054 = vmatprep.subr.mxu0 0.0
        %1055 = vmatpush1.msra.mxu0 0.0
        %1056 = vmatprep.subr.mxu0 0.0
        %1057 = vmatpush1.msra.mxu0 0.0
        %1058 = vmatprep.subr.mxu0 0.0
        %1059 = vmatpush1.msra.mxu0 0.0
        %1060 = vmatprep.subr.mxu0 0.0
        %1061 = vmatpush1.msra.mxu0 0.0
        %1062 = vmatprep.subr.mxu0 0.0
        %1063 = vmatpush1.msra.mxu0 0.0
        %1064 = vmatprep.subr.mxu0 0.0
        %1065 = vmatpush1.msra.mxu0 0.0
        %1066 = vmatprep.subr.mxu0 0.0
        %1067 = vmatpush1.msra.mxu0 0.0
        %1068 = vmatprep.subr.mxu0 0.0
        %1069 = vmatpush1.msra.mxu0 0.0
        %1070 = vmatprep.subr.mxu0 0.0
        %1071 = vmatpush1.msra.mxu0 0.0
        %1072 = vmatprep.subr.mxu0 0.0
        %1073 = vmatpush1.msra.mxu0 0.0
        %1074 = vmatprep.subr.mxu0 0.0
        %1075 = vmatpush1.msra.mxu0 0.0
        %1076 = vmatprep.mubr.f32.mxu0 0.0
        %1077 = vmatmul.mubr.f32.gmra.mrb[0].mxu0 %v1010
        %v1078 = vpop.f32.mrb[0].mxu0
        %v1079 = vadd.f32 0.0, %v1078
        %v1080 = vpop.f32.mrb[0].mxu0
        %1081 = vdwg.mxu0
        %v1082 = vrcp.pop %v1005
        %v1083 = vmul.f32 %v1079, %v1082
        %1084 = vrot.lane.b32.xlu0 %v505, 104
        %v1085 = vpop.permute.xlu0 %1084
        %1086 = vrot.lane.b32.xlu0 %v587, 104
        %v1087 = vpop.permute.xlu0 %1086
        %v1088 = vsel %vm590, %v1085, 0
        %v1090 = vsel %vm590, %v1087, 0
        %1092 = vmatprep.subr.mxu0 0.0
        %1093 = vmatpush1.xpose.msra.mxu0 %v1090
        %1094 = vmatprep.subr.mxu0 0.0
        %1095 = vmatpush1.xpose.msra.mxu0 0.0
        %1096 = vmatprep.subr.mxu0 0.0
        %1097 = vmatpush1.xpose.msra.mxu0 0.0
        %1098 = vmatprep.subr.mxu0 0.0
        %1099 = vmatpush1.xpose.msra.mxu0 0.0
        %1100 = vmatprep.subr.mxu0 0.0
        %1101 = vmatpush1.xpose.msra.mxu0 0.0
        %1102 = vmatprep.subr.mxu0 0.0
        %1103 = vmatpush1.xpose.msra.mxu0 0.0
        %1104 = vmatprep.subr.mxu0 0.0
        %1105 = vmatpush1.xpose.msra.mxu0 0.0
        %1106 = vmatprep.subr.mxu0 0.0
        %1107 = vmatpush1.xpose.msra.mxu0 0.0
        %1108 = vmatprep.subr.mxu0 0.0
        %1109 = vmatpush1.xpose.msra.mxu0 0.0
        %1110 = vmatprep.subr.mxu0 0.0
        %1111 = vmatpush1.xpose.msra.mxu0 0.0
        %1112 = vmatprep.subr.mxu0 0.0
        %1113 = vmatpush1.xpose.msra.mxu0 0.0
        %1114 = vmatprep.subr.mxu0 0.0
        %1115 = vmatpush1.xpose.msra.mxu0 0.0
        %1116 = vmatprep.subr.mxu0 0.0
        %1117 = vmatpush1.xpose.msra.mxu0 0.0
        %1118 = vmatprep.subr.mxu0 0.0
        %1119 = vmatpush1.xpose.msra.mxu0 0.0
        %1120 = vmatprep.subr.mxu0 0.0
        %1121 = vmatpush1.xpose.msra.mxu0 0.0
        %1122 = vmatprep.subr.mxu0 0.0
        %1123 = vmatpush1.xpose.msra.mxu0 0.0
        %1124 = vmatprep.subr.mxu0 0.0
        %1125 = vmatpush1.xpose.msra.mxu0 0.0
        %1126 = vmatprep.subr.mxu0 0.0
        %1127 = vmatpush1.xpose.msra.mxu0 0.0
        %1128 = vmatprep.subr.mxu0 0.0
        %1129 = vmatpush1.xpose.msra.mxu0 0.0
        %1130 = vmatprep.subr.mxu0 0.0
        %1131 = vmatpush1.xpose.msra.mxu0 0.0
        %1132 = vmatprep.subr.mxu0 0.0
        %1133 = vmatpush1.xpose.msra.mxu0 0.0
        %1134 = vmatprep.subr.mxu0 0.0
        %1135 = vmatpush1.xpose.msra.mxu0 0.0
        %1136 = vmatprep.subr.mxu0 0.0
        %1137 = vmatpush1.xpose.msra.mxu0 0.0
        %1138 = vmatprep.subr.mxu0 0.0
        %1139 = vmatpush1.xpose.msra.mxu0 0.0
        %1140 = vmatprep.subr.mxu0 0.0
        %1141 = vmatpush1.xpose.msra.mxu0 0.0
        %1142 = vmatprep.subr.mxu0 0.0
        %1143 = vmatpush1.xpose.msra.mxu0 0.0
        %1144 = vmatprep.subr.mxu0 0.0
        %1145 = vmatpush1.xpose.msra.mxu0 0.0
        %1146 = vmatprep.subr.mxu0 0.0
        %1147 = vmatpush1.xpose.msra.mxu0 0.0
        %1148 = vmatprep.subr.mxu0 0.0
        %1149 = vmatpush1.xpose.msra.mxu0 0.0
        %1150 = vmatprep.subr.mxu0 0.0
        %1151 = vmatpush1.xpose.msra.mxu0 0.0
        %1152 = vmatprep.subr.mxu0 0.0
        %1153 = vmatpush1.xpose.msra.mxu0 0.0
        %1154 = vmatprep.subr.mxu0 0.0
        %1155 = vmatpush1.xpose.msra.mxu0 0.0
        %1156 = vmatprep.mubr.f32.mxu0 0.0
        %1157 = vmatmul.mubr.f32.gmra.mrb[0].mxu0 %v1088
        %v1158 = vpop.f32.mrb[0].mxu0
        %v1159 = vadd.f32 0.0, %v1158
        %v1160 = vpop.f32.mrb[0].mxu0
        %1161 = vdwg.mxu0
        %v1162 = vsel %vm590, %v1159, -inf
        %1163 = vmax.xlane.f32.xlu0 %v1162
        %v1164 = vpop.xlane.xlu0 %1163
        %v1165 = vsub.f32 %v1159, %v1164
        %v1166 = vmul.f32 %v1165, 1.442695
        %v1167 = vpow.pop %v1166
        %v1168 = vsel %vm590, %v1167, 0.0
        %1169 = vadd.xlane.f32.xlu0 %v1168
        %v1170 = vpop.xlane.xlu0 %1169
        %1171 = vrot.lane.b32.xlu0 %v587, 72
        %v1172 = vpop.permute.xlu0 %1171
        %v1175 = vsel %vm590, %v1167, 0
        %1177 = vmatprep.subr.mxu0 0.0
        %1178 = vmatpush1.msra.mxu0 %v1172
        %1179 = vmatprep.subr.mxu0 0.0
        %1180 = vmatpush1.msra.mxu0 0.0
        %1181 = vmatprep.subr.mxu0 0.0
        %1182 = vmatpush1.msra.mxu0 0.0
        %1183 = vmatprep.subr.mxu0 0.0
        %1184 = vmatpush1.msra.mxu0 0.0
        %1185 = vmatprep.subr.mxu0 0.0
        %1186 = vmatpush1.msra.mxu0 0.0
        %1187 = vmatprep.subr.mxu0 0.0
        %1188 = vmatpush1.msra.mxu0 0.0
        %1189 = vmatprep.subr.mxu0 0.0
        %1190 = vmatpush1.msra.mxu0 0.0
        %1191 = vmatprep.subr.mxu0 0.0
        %1192 = vmatpush1.msra.mxu0 0.0
        %1193 = vmatprep.subr.mxu0 0.0
        %1194 = vmatpush1.msra.mxu0 0.0
        %1195 = vmatprep.subr.mxu0 0.0
        %1196 = vmatpush1.msra.mxu0 0.0
        %1197 = vmatprep.subr.mxu0 0.0
        %1198 = vmatpush1.msra.mxu0 0.0
        %1199 = vmatprep.subr.mxu0 0.0
        %1200 = vmatpush1.msra.mxu0 0.0
        %1201 = vmatprep.subr.mxu0 0.0
        %1202 = vmatpush1.msra.mxu0 0.0
        %1203 = vmatprep.subr.mxu0 0.0
        %1204 = vmatpush1.msra.mxu0 0.0
        %1205 = vmatprep.subr.mxu0 0.0
        %1206 = vmatpush1.msra.mxu0 0.0
        %1207 = vmatprep.subr.mxu0 0.0
        %1208 = vmatpush1.msra.mxu0 0.0
        %1209 = vmatprep.subr.mxu0 0.0
        %1210 = vmatpush1.msra.mxu0 0.0
        %1211 = vmatprep.subr.mxu0 0.0
        %1212 = vmatpush1.msra.mxu0 0.0
        %1213 = vmatprep.subr.mxu0 0.0
        %1214 = vmatpush1.msra.mxu0 0.0
        %1215 = vmatprep.subr.mxu0 0.0
        %1216 = vmatpush1.msra.mxu0 0.0
        %1217 = vmatprep.subr.mxu0 0.0
        %1218 = vmatpush1.msra.mxu0 0.0
        %1219 = vmatprep.subr.mxu0 0.0
        %1220 = vmatpush1.msra.mxu0 0.0
        %1221 = vmatprep.subr.mxu0 0.0
        %1222 = vmatpush1.msra.mxu0 0.0
        %1223 = vmatprep.subr.mxu0 0.0
        %1224 = vmatpush1.msra.mxu0 0.0
        %1225 = vmatprep.subr.mxu0 0.0
        %1226 = vmatpush1.msra.mxu0 0.0
        %1227 = vmatprep.subr.mxu0 0.0
        %1228 = vmatpush1.msra.mxu0 0.0
        %1229 = vmatprep.subr.mxu0 0.0
        %1230 = vmatpush1.msra.mxu0 0.0
        %1231 = vmatprep.subr.mxu0 0.0
        %1232 = vmatpush1.msra.mxu0 0.0
        %1233 = vmatprep.subr.mxu0 0.0
        %1234 = vmatpush1.msra.mxu0 0.0
        %1235 = vmatprep.subr.mxu0 0.0
        %1236 = vmatpush1.msra.mxu0 0.0
        %1237 = vmatprep.subr.mxu0 0.0
        %1238 = vmatpush1.msra.mxu0 0.0
        %1239 = vmatprep.subr.mxu0 0.0
        %1240 = vmatpush1.msra.mxu0 0.0
        %1241 = vmatprep.mubr.f32.mxu0 0.0
        %1242 = vmatmul.mubr.f32.gmra.mrb[0].mxu0 %v1175
        %v1243 = vpop.f32.mrb[0].mxu0
        %v1244 = vadd.f32 0.0, %v1243
        %v1245 = vpop.f32.mrb[0].mxu0
        %1246 = vdwg.mxu0
        %v1247 = vrcp.pop %v1170
        %v1248 = vmul.f32 %v1244, %v1247
        %1250 = vrot.lane.b32.xlu0 %v918, 8
        %v1251 = vpop.permute.xlu0 %1250
        %1254 = vrot.lane.b32.xlu0 %v1083, 16
        %v1255 = vpop.permute.xlu0 %1254
        %1258 = vrot.lane.b32.xlu0 %v1248, 24
        %v1259 = vpop.permute.xlu0 %1258
        %v1261 = vsel %vm590, %v753, %v1251
        %vm1262 = vcmask 130048
        %v1263 = vsel %vm1262, %v1261, %v1255
        %vm1264 = vcmask 195584
        %v1265 = vsel %vm1264, %v1263, %v1259
        %v1266 = vld [vmem:[#allocation10] sm:$0xff]
        %v1267 = vld [vmem:[#allocation10 + $0x8] sm:$0xff]
        %v1268 = vld [vmem:[#allocation10 + $0x10] sm:$0xff]
        %v1269 = vld [vmem:[#allocation10 + $0x18] sm:$0xff]
        %v1270 = vld [vmem:[%s7] sm:$0x1]
        %v1272 = vlaneseq
        %v1273 = vshrl.u32 %v1272, 7
        %v1274 = vsub.s32 0, %v1273
        %v1275 = vrot.slane %v1270, %v1274
        %v1278 = vsel %vm431, %v1265, 0
        %1280 = vmatprep.subr.mxu0 0.0
        %1281 = vmatpush1.msra.mxu0 %v1266
        %1282 = vmatprep.subr.mxu0 0.0
        %1283 = vmatpush1.msra.mxu0 %v1267
        %1284 = vmatprep.subr.mxu0 0.0
        %1285 = vmatpush1.msra.mxu0 %v1268
        %1286 = vmatprep.subr.mxu0 0.0
        %1287 = vmatpush1.msra.mxu0 %v1269
        %1288 = vmatprep.subr.mxu0 0.0
        %1289 = vmatpush1.msra.mxu0 0.0
        %1290 = vmatprep.subr.mxu0 0.0
        %1291 = vmatpush1.msra.mxu0 0.0
        %1292 = vmatprep.subr.mxu0 0.0
        %1293 = vmatpush1.msra.mxu0 0.0
        %1294 = vmatprep.subr.mxu0 0.0
        %1295 = vmatpush1.msra.mxu0 0.0
        %1296 = vmatprep.subr.mxu0 0.0
        %1297 = vmatpush1.msra.mxu0 0.0
        %1298 = vmatprep.subr.mxu0 0.0
        %1299 = vmatpush1.msra.mxu0 0.0
        %1300 = vmatprep.subr.mxu0 0.0
        %1301 = vmatpush1.msra.mxu0 0.0
        %1302 = vmatprep.subr.mxu0 0.0
        %1303 = vmatpush1.msra.mxu0 0.0
        %1304 = vmatprep.subr.mxu0 0.0
        %1305 = vmatpush1.msra.mxu0 0.0
        %1306 = vmatprep.subr.mxu0 0.0
        %1307 = vmatpush1.msra.mxu0 0.0
        %1308 = vmatprep.subr.mxu0 0.0
        %1309 = vmatpush1.msra.mxu0 0.0
        %1310 = vmatprep.subr.mxu0 0.0
        %1311 = vmatpush1.msra.mxu0 0.0
        %1312 = vmatprep.subr.mxu0 0.0
        %1313 = vmatpush1.msra.mxu0 0.0
        %1314 = vmatprep.subr.mxu0 0.0
        %1315 = vmatpush1.msra.mxu0 0.0
        %1316 = vmatprep.subr.mxu0 0.0
        %1317 = vmatpush1.msra.mxu0 0.0
        %1318 = vmatprep.subr.mxu0 0.0
        %1319 = vmatpush1.msra.mxu0 0.0
        %1320 = vmatprep.subr.mxu0 0.0
        %1321 = vmatpush1.msra.mxu0 0.0
        %1322 = vmatprep.subr.mxu0 0.0
        %1323 = vmatpush1.msra.mxu0 0.0
        %1324 = vmatprep.subr.mxu0 0.0
        %1325 = vmatpush1.msra.mxu0 0.0
        %1326 = vmatprep.subr.mxu0 0.0
        %1327 = vmatpush1.msra.mxu0 0.0
        %1328 = vmatprep.subr.mxu0 0.0
        %1329 = vmatpush1.msra.mxu0 0.0
        %1330 = vmatprep.subr.mxu0 0.0
        %1331 = vmatpush1.msra.mxu0 0.0
        %1332 = vmatprep.subr.mxu0 0.0
        %1333 = vmatpush1.msra.mxu0 0.0
        %1334 = vmatprep.subr.mxu0 0.0
        %1335 = vmatpush1.msra.mxu0 0.0
        %1336 = vmatprep.subr.mxu0 0.0
        %1337 = vmatpush1.msra.mxu0 0.0
        %1338 = vmatprep.subr.mxu0 0.0
        %1339 = vmatpush1.msra.mxu0 0.0
        %1340 = vmatprep.subr.mxu0 0.0
        %1341 = vmatpush1.msra.mxu0 0.0
        %1342 = vmatprep.subr.mxu0 0.0
        %1343 = vmatpush1.msra.mxu0 0.0
        %1344 = vmatprep.mubr.f32.mxu0 0.0
        %1345 = vmatmul.mubr.f32.gmra.mrb[0].mxu0 %v1278
        %v1346 = vpop.f32.mrb[0].mxu0
        %v1347 = vadd.f32 %v1275, %v1346
        %v1348 = vpop.f32.mrb[0].mxu0
        %1349 = vdwg.mxu0
        %1350 = vst.msk [vmem:[%s417] sm:$0xff] %vm431, %v1347
        %s1351 = sand.u32 %s231, 1
        %s1352 = scalar_lea.sflag [#allocation4], %s1351
        %s1353 = sand.u32 %s231, 1
        %s1354 = smul.addr %s1353, 8
        %s1355 = scalar_lea.vmem [#allocation11], %s1354
        // Predicated region
        $region73: #{tpu_custom_call.1} parent=51 // pred_check
          %p1356 = pneg %p241
        $region74: #{tpu_custom_call.1} parent=51 // pred_check_branch
          %1358 = sbr.rel (%p1356) target = $region76
        $region75: #{tpu_custom_call.1} parent=51 // pred_region
          %s1360 = ssub.s32 128, 128
          %1361 = vsyncadd %s1352, %s1360
          %s1362 = sadd.s32 %s34, %s33
          %s1363 = smul.addr %s1362, 128
          %s1364 = scalar_lea.hbm %s8, %s1363
          %s1366 = sshll.u32 %s1355, 4
          %s1367 = int_to_ptr.vmem [resolvable:$true] %s1366
          %1369 = dma.vmem_to_hbm [thread:$0]  %s1367, 128, %s1364, %s1352
        $region76: #{tpu_custom_call.1} parent=51 // pred_fallthru
          _
      $region52: #{tpu_custom_call.1} parent=5 // pred_fallthru
        _
      %p1370 = scmp.le.s32.totalorder 2, %s24
      // Predicated region
      $region77: #{tpu_custom_call.1} parent=5 // pred_check
        %p1371 = pneg %p1370
      $region78: #{tpu_custom_call.1} parent=5 // pred_check_branch
        %1373 = sbr.rel (%p1371) target = $region80
      $region79: #{tpu_custom_call.1} parent=5 // pred_region
        %s1374 = ssub.s32 %s24, 2
        // Predicated region
        $region81: #{tpu_custom_call.1} parent=79 // pred_check
          %p1375 = pneg %p247
        $region82: #{tpu_custom_call.1} parent=79 // pred_check_branch
          %1377 = sbr.rel (%p1375) target = $region84
        $region83: #{tpu_custom_call.1} parent=79 // pred_region
          %s1378 = sand.u32 %s232, 1
          %s1379 = scalar_lea.sflag [#allocation4], %s1378
          %s1380 = sand.u32 %s232, 1
          %s1381 = smul.addr %s1380, 8
          %s1382 = scalar_lea.vmem [#allocation11], %s1381
          %1383 = dma.done %s1379, 128
        $region84: #{tpu_custom_call.1} parent=79 // pred_fallthru
          _
      $region80: #{tpu_custom_call.1} parent=5 // pred_fallthru
        _
    $region6: #{tpu_custom_call.1} parent=1 // loop_footer
      %s28 = sadd.s32 1, %s24
    $region7: #{tpu_custom_call.1} parent=1 // loop_footer_branch
      %23 = sbr.rel target = $region3
    $region8: #{tpu_custom_call.1} parent=1 // loop_exit
      _
    %1384 = vsyncpa [#allocation3], 1
    %s1385 = scalar_lea.sflag [#allocation3], 1
    %1386 = vsyncpa %s1385, 1
    %1387 = vsyncpa [#allocation6], 1
    %s1388 = scalar_lea.sflag [#allocation6], 1
    %1389 = vsyncpa %s1388, 1
    %1390 = vsyncpa [#allocation9], 1
    %1391 = vsyncpa [#allocation4], 1
    %s1392 = scalar_lea.sflag [#allocation4], 1
    %1393 = vsyncpa %s1392, 1

</llo_original>
